<compile_context>
chip_gen: v5e
topology: v5e:2x2
jax: 0.10.0
libtpu: 0.0.40
codegen_flags: <defaults>
</compile_context>

<pallas_src>
import jax
import jax.numpy as jnp
from jax.experimental import pallas as pl
from jax.experimental.pallas import tpu as pltpu


_OUT_LANES = 128  # lane-dense packed output width (mim | textseg | zero pad)


# ----------------------------------------------------------------------------
# Fused Pallas kernel: whole per-pixel chain for one row tile
# ----------------------------------------------------------------------------
def _fused_segmim_kernel(x_ref, m_ref,
                         w0_ref, b0_ref, w1_ref, b1_ref,
                         wp_ref, bp_ref,
                         wd_ref, ws_ref, bo_ref,
                         o_ref):
    # MIM masking fused in (free VPU work alongside the MXU pushes).
    x = x_ref[...] * (1.0 - m_ref[...])                       # (RM, Cimg)

    # encoder: two stacked 1x1-conv (masked patch-embed style) stages + GELU.
    f0 = jax.nn.gelu(
        jnp.dot(x, w0_ref[...], preferred_element_type=jnp.float32)
        + b0_ref[...])                                        # (RM, mid)
    f1 = jax.nn.gelu(
        jnp.dot(f0, w1_ref[...], preferred_element_type=jnp.float32)
        + b1_ref[...])                                        # (RM, num_channels)

    # pixel_embed (nn.Linear) on the last encoder feature, NHWC order.
    enc_feat = (jnp.dot(f1, wp_ref[...], preferred_element_type=jnp.float32)
                + bp_ref[...])                                # (RM, embed_dim)

    # decoder (MIM recon) + seg_head, packed into one 128-lane output slab:
    # columns [0:Cimg) = mim, [Cimg:Cimg+ncls) = textseg, rest zero padding.
    # TODO(synk): use precision=jax.lax.Precision.HIGHEST if bit-level parity
    # with a PyTorch f32 nn.Linear is required.
    out = (jnp.dot(enc_feat, wd_ref[...], preferred_element_type=jnp.float32)
           + jnp.dot(f1, ws_ref[...], preferred_element_type=jnp.float32)
           + bo_ref[...])                                     # (RM, 128)
    o_ref[...] = out.astype(o_ref.dtype)


def fused_segmim(params, x_flat, m_flat, *, row_tile=256):
    """x_flat: (M, Cimg) pixels, m_flat: (M, 1) -> (mim (M,Cimg), seg (M,ncls))."""
    M, Cimg = x_flat.shape
    rm = min(row_tile, M)
    M_pad = pl.cdiv(M, rm) * rm
    if M_pad != M:  # handle pixel counts not divisible by the row tile
        x_flat = jnp.pad(x_flat, ((0, M_pad - M), (0, 0)))
        m_flat = jnp.pad(m_flat, ((0, M_pad - M), (0, 0)))

    w0, b0 = params["enc0_w"], params["enc0_b"].reshape(1, -1)
    w1, b1 = params["enc1_w"], params["enc1_b"].reshape(1, -1)
    wp, bp = params["pix_w"], params["pix_b"].reshape(1, -1)
    dec_w, dec_b = params["dec_w"], params["dec_b"]
    seg_w, seg_b = params["seg_w"], params["seg_b"]

    n_mim = dec_w.shape[1]
    n_seg = seg_w.shape[1]
    assert n_mim + n_seg <= _OUT_LANES

    # Zero-padded weight/bias slabs so the two heads land in one lane-dense
    # 128-wide output (single unmasked store per tile).
    wd = jnp.zeros((dec_w.shape[0], _OUT_LANES), dec_w.dtype).at[:, :n_mim].set(dec_w)
    ws = (jnp.zeros((seg_w.shape[0], _OUT_LANES), seg_w.dtype)
          .at[:, n_mim:n_mim + n_seg].set(seg_w))
    bo = (jnp.zeros((1, _OUT_LANES), dec_b.dtype)
          .at[0, :n_mim].set(dec_b)
          .at[0, n_mim:n_mim + n_seg].set(seg_b))

    const = lambda i: (0, 0)     # weights/biases: resident, never re-indexed
    rows = lambda i: (i, 0)

    out = pl.pallas_call(
        _fused_segmim_kernel,
        out_shape=jax.ShapeDtypeStruct((M_pad, _OUT_LANES), x_flat.dtype),
        grid=(M_pad // rm,),
        in_specs=[
            pl.BlockSpec((rm, Cimg), rows),
            pl.BlockSpec((rm, 1), rows),
            pl.BlockSpec(w0.shape, const),
            pl.BlockSpec(b0.shape, const),
            pl.BlockSpec(w1.shape, const),
            pl.BlockSpec(b1.shape, const),
            pl.BlockSpec(wp.shape, const),
            pl.BlockSpec(bp.shape, const),
            pl.BlockSpec(wd.shape, const),
            pl.BlockSpec(ws.shape, const),
            pl.BlockSpec(bo.shape, const),
        ],
        out_specs=pl.BlockSpec((rm, _OUT_LANES), rows),
        compiler_params=pltpu.CompilerParams(
            dimension_semantics=("parallel",)),
    )(x_flat, m_flat, w0, b0, w1, b1, wp, bp, wd, ws, bo)

    mim_flat = out[:M, :n_mim]
    seg_flat = out[:M, n_mim:n_mim + n_seg]
    return mim_flat, seg_flat


# ----------------------------------------------------------------------------
# Layout helpers (glue, plain JAX)
# ----------------------------------------------------------------------------
def nchw_to_flat(x):
    # (B, C, H, W) -> (B*H*W, C)
    B, C, H, W = x.shape
    return jnp.transpose(x, (0, 2, 3, 1)).reshape(B * H * W, C)


def flat_to_nchw(x_flat, B, H, W):
    # (B*H*W, C) -> (B, C, H, W)
    C = x_flat.shape[-1]
    return jnp.transpose(x_flat.reshape(B, H, W, C), (0, 3, 1, 2))


# ----------------------------------------------------------------------------
# Synthetic ViTEraserSegMIM parameters (deterministic)
# ----------------------------------------------------------------------------
def init_params(img_channels=4, num_channels=32, embed_dim=16, num_classes=2,
                seed=42):
    keys = jax.random.split(jax.random.PRNGKey(seed), 10)
    mid = num_channels // 2

    def lin(kw, kb, fan_in, fan_out):
        w = jax.random.normal(kw, (fan_in, fan_out), jnp.float32) / jnp.sqrt(fan_in)
        b = 0.01 * jax.random.normal(kb, (fan_out,), jnp.float32)
        return w, b

    p = {}
    # encoder: two stacked 1x1-conv (masked patch-embed style) stages
    p["enc0_w"], p["enc0_b"] = lin(keys[0], keys[1], img_channels, mid)
    p["enc1_w"], p["enc1_b"] = lin(keys[2], keys[3], mid, num_channels)
    # pixel_embed: nn.Linear(encoder.num_channels, decoder.embed_dim)
    p["pix_w"], p["pix_b"] = lin(keys[4], keys[5], num_channels, embed_dim)
    # decoder: reconstructs image channels from embedded features (MIM head)
    p["dec_w"], p["dec_b"] = lin(keys[6], keys[7], embed_dim, img_channels)
    # seg_head: per-pixel text-segmentation logits
    p["seg_w"], p["seg_b"] = lin(keys[8], keys[9], num_channels, num_classes)
    return p


# ----------------------------------------------------------------------------
# Forward pass (mirrors ViTEraserSegMIM.forward)
# ----------------------------------------------------------------------------
def vit_eraser_segmim_forward(params, images, masks):
    """images: (B, C, H, W) NCHW float32; masks: (B, 1, H, W) in {0,1}."""
    B, C, H, W = images.shape

    x_flat = nchw_to_flat(images)        # (B*H*W, C)
    m_flat = nchw_to_flat(masks)         # (B*H*W, 1)

    # Entire encoder -> pixel_embed -> decoder / seg_head chain in one kernel;
    # intermediate multi-scale features never touch HBM.
    mim_flat, seg_flat = fused_segmim(params, x_flat, m_flat)

    preds = {
        "mim": flat_to_nchw(mim_flat, B, H, W),        # (B, C, H, W)
        "textseg": flat_to_nchw(seg_flat, B, H, W),    # (B, num_classes, H, W)
    }
    return preds


# ----------------------------------------------------------------------------
# Main
# ----------------------------------------------------------------------------
if __name__ == "__main__":
    B, C, H, W = 2, 4, 16, 16
    key = jax.random.PRNGKey(0)
    k_img, k_msk = jax.random.split(key)

    images = jax.random.normal(k_img, (B, C, H, W), jnp.float32)
    masks = (jax.random.uniform(k_msk, (B, 1, H, W)) > 0.5).astype(jnp.float32)

    params = init_params(img_channels=C, num_channels=32, embed_dim=16,
                         num_classes=2)

    preds = jax.jit(vit_eraser_segmim_forward)(params, images, masks)
    jax.block_until_ready(preds)

    assert preds["mim"].shape == (B, C, H, W)
    assert preds["textseg"].shape == (B, 2, H, W)
    assert jnp.all(jnp.isfinite(preds["mim"]))
    assert jnp.all(jnp.isfinite(preds["textseg"]))
    print("KERNEL_OK")
</pallas_src>

<mosaic_0001>
module attributes {stable_mosaic.version = 11 : i64} {
  func.func @_fused_segmim_kernel(%arg0: i32, %arg1: memref<256x4xf32, #tpu.memory_space<vmem>>, %arg2: memref<256x1xf32, #tpu.memory_space<vmem>>, %arg3: memref<4x16xf32, #tpu.memory_space<vmem>>, %arg4: memref<1x16xf32, #tpu.memory_space<vmem>>, %arg5: memref<16x32xf32, #tpu.memory_space<vmem>>, %arg6: memref<1x32xf32, #tpu.memory_space<vmem>>, %arg7: memref<32x16xf32, #tpu.memory_space<vmem>>, %arg8: memref<1x16xf32, #tpu.memory_space<vmem>>, %arg9: memref<16x128xf32, #tpu.memory_space<vmem>>, %arg10: memref<32x128xf32, #tpu.memory_space<vmem>>, %arg11: memref<1x128xf32, #tpu.memory_space<vmem>>, %arg12: memref<256x128xf32, #tpu.memory_space<vmem>>) attributes {dimension_semantics = [#tpu.dimension_semantics<parallel>], iteration_bounds = array<i64: 2>, scalar_prefetch = 0 : i64, scratch_operands = 0 : i64, tpu.core_type = #tpu.core_type<tc>, window_params = [{transform_indices = @transform_0, window_bounds = array<i64: 256, 4>}, {transform_indices = @transform_1, window_bounds = array<i64: 256, 1>}, {pipeline_mode = #tpu.pipeline_mode<synchronous>, transform_indices = @transform_2, window_bounds = array<i64: 4, 16>}, {pipeline_mode = #tpu.pipeline_mode<synchronous>, transform_indices = @transform_3, window_bounds = array<i64: 1, 16>}, {pipeline_mode = #tpu.pipeline_mode<synchronous>, transform_indices = @transform_4, window_bounds = array<i64: 16, 32>}, {pipeline_mode = #tpu.pipeline_mode<synchronous>, transform_indices = @transform_5, window_bounds = array<i64: 1, 32>}, {pipeline_mode = #tpu.pipeline_mode<synchronous>, transform_indices = @transform_6, window_bounds = array<i64: 32, 16>}, {pipeline_mode = #tpu.pipeline_mode<synchronous>, transform_indices = @transform_7, window_bounds = array<i64: 1, 16>}, {pipeline_mode = #tpu.pipeline_mode<synchronous>, transform_indices = @transform_8, window_bounds = array<i64: 16, 128>}, {pipeline_mode = #tpu.pipeline_mode<synchronous>, transform_indices = @transform_9, window_bounds = array<i64: 32, 128>}, {pipeline_mode = #tpu.pipeline_mode<synchronous>, transform_indices = @transform_10, window_bounds = array<i64: 1, 128>}, {transform_indices = @transform_11, window_bounds = array<i64: 256, 128>}]} {
    %c0 = arith.constant 0 : index
    %c0_0 = arith.constant 0 : index
    %0 = vector.load %arg1[%c0, %c0_0] : memref<256x4xf32, #tpu.memory_space<vmem>>, vector<256x4xf32>
    %c0_1 = arith.constant 0 : index
    %c0_2 = arith.constant 0 : index
    %1 = vector.load %arg2[%c0_1, %c0_2] : memref<256x1xf32, #tpu.memory_space<vmem>>, vector<256x1xf32>
    %cst = arith.constant 1.000000e+00 : f32
    %2 = vector.broadcast %cst : f32 to vector<256x1xf32>
    %3 = arith.subf %2, %1 : vector<256x1xf32>
    %4 = vector.broadcast %3 : vector<256x1xf32> to vector<256x4xf32>
    %5 = arith.mulf %0, %4 : vector<256x4xf32>
    %c0_3 = arith.constant 0 : index
    %c0_4 = arith.constant 0 : index
    %6 = vector.load %arg3[%c0_3, %c0_4] : memref<4x16xf32, #tpu.memory_space<vmem>>, vector<4x16xf32>
    %cst_5 = arith.constant dense<0.000000e+00> : vector<256x16xf32>
    %7 = tpu.matmul %5, %6, %cst_5 {dimension_numbers = #tpu.dot_dimension_numbers<[1], [0], [0], [1], [0, 0, 1, 1], [], []>} : vector<256x4xf32>, vector<4x16xf32>, vector<256x16xf32> -> vector<256x16xf32>
    %c0_6 = arith.constant 0 : index
    %c0_7 = arith.constant 0 : index
    %8 = vector.load %arg4[%c0_6, %c0_7] : memref<1x16xf32, #tpu.memory_space<vmem>>, vector<1x16xf32>
    %9 = vector.broadcast %8 : vector<1x16xf32> to vector<256x16xf32>
    %10 = arith.addf %7, %9 : vector<256x16xf32>
    %11 = arith.mulf %10, %10 : vector<256x16xf32>
    %12 = arith.mulf %10, %11 : vector<256x16xf32>
    %cst_8 = arith.constant 4.471500e-02 : f32
    %13 = vector.broadcast %cst_8 : f32 to vector<256x16xf32>
    %14 = arith.mulf %13, %12 : vector<256x16xf32>
    %15 = arith.addf %10, %14 : vector<256x16xf32>
    %cst_9 = arith.constant 0.797884583 : f32
    %16 = vector.broadcast %cst_9 : f32 to vector<256x16xf32>
    %17 = arith.mulf %16, %15 : vector<256x16xf32>
    %18 = math.tanh %17 : vector<256x16xf32>
    %cst_10 = arith.constant 1.000000e+00 : f32
    %19 = vector.broadcast %cst_10 : f32 to vector<256x16xf32>
    %20 = arith.addf %19, %18 : vector<256x16xf32>
    %cst_11 = arith.constant 5.000000e-01 : f32
    %21 = vector.broadcast %cst_11 : f32 to vector<256x16xf32>
    %22 = arith.mulf %21, %20 : vector<256x16xf32>
    %23 = arith.mulf %10, %22 : vector<256x16xf32>
    %c0_12 = arith.constant 0 : index
    %c0_13 = arith.constant 0 : index
    %24 = vector.load %arg5[%c0_12, %c0_13] : memref<16x32xf32, #tpu.memory_space<vmem>>, vector<16x32xf32>
    %cst_14 = arith.constant dense<0.000000e+00> : vector<256x32xf32>
    %25 = tpu.matmul %23, %24, %cst_14 {dimension_numbers = #tpu.dot_dimension_numbers<[1], [0], [0], [1], [0, 0, 1, 1], [], []>} : vector<256x16xf32>, vector<16x32xf32>, vector<256x32xf32> -> vector<256x32xf32>
    %c0_15 = arith.constant 0 : index
    %c0_16 = arith.constant 0 : index
    %26 = vector.load %arg6[%c0_15, %c0_16] : memref<1x32xf32, #tpu.memory_space<vmem>>, vector<1x32xf32>
    %27 = vector.broadcast %26 : vector<1x32xf32> to vector<256x32xf32>
    %28 = arith.addf %25, %27 : vector<256x32xf32>
    %29 = arith.mulf %28, %28 : vector<256x32xf32>
    %30 = arith.mulf %28, %29 : vector<256x32xf32>
    %cst_17 = arith.constant 4.471500e-02 : f32
    %31 = vector.broadcast %cst_17 : f32 to vector<256x32xf32>
    %32 = arith.mulf %31, %30 : vector<256x32xf32>
    %33 = arith.addf %28, %32 : vector<256x32xf32>
    %cst_18 = arith.constant 0.797884583 : f32
    %34 = vector.broadcast %cst_18 : f32 to vector<256x32xf32>
    %35 = arith.mulf %34, %33 : vector<256x32xf32>
    %36 = math.tanh %35 : vector<256x32xf32>
    %cst_19 = arith.constant 1.000000e+00 : f32
    %37 = vector.broadcast %cst_19 : f32 to vector<256x32xf32>
    %38 = arith.addf %37, %36 : vector<256x32xf32>
    %cst_20 = arith.constant 5.000000e-01 : f32
    %39 = vector.broadcast %cst_20 : f32 to vector<256x32xf32>
    %40 = arith.mulf %39, %38 : vector<256x32xf32>
    %41 = arith.mulf %28, %40 : vector<256x32xf32>
    %c0_21 = arith.constant 0 : index
    %c0_22 = arith.constant 0 : index
    %42 = vector.load %arg7[%c0_21, %c0_22] : memref<32x16xf32, #tpu.memory_space<vmem>>, vector<32x16xf32>
    %cst_23 = arith.constant dense<0.000000e+00> : vector<256x16xf32>
    %43 = tpu.matmul %41, %42, %cst_23 {dimension_numbers = #tpu.dot_dimension_numbers<[1], [0], [0], [1], [0, 0, 1, 1], [], []>} : vector<256x32xf32>, vector<32x16xf32>, vector<256x16xf32> -> vector<256x16xf32>
    %c0_24 = arith.constant 0 : index
    %c0_25 = arith.constant 0 : index
    %44 = vector.load %arg8[%c0_24, %c0_25] : memref<1x16xf32, #tpu.memory_space<vmem>>, vector<1x16xf32>
    %45 = vector.broadcast %44 : vector<1x16xf32> to vector<256x16xf32>
    %46 = arith.addf %43, %45 : vector<256x16xf32>
    %c0_26 = arith.constant 0 : index
    %c0_27 = arith.constant 0 : index
    %47 = vector.load %arg9[%c0_26, %c0_27] : memref<16x128xf32, #tpu.memory_space<vmem>>, vector<16x128xf32>
    %cst_28 = arith.constant dense<0.000000e+00> : vector<256x128xf32>
    %48 = tpu.matmul %46, %47, %cst_28 {dimension_numbers = #tpu.dot_dimension_numbers<[1], [0], [0], [1], [0, 0, 1, 1], [], []>} : vector<256x16xf32>, vector<16x128xf32>, vector<256x128xf32> -> vector<256x128xf32>
    %c0_29 = arith.constant 0 : index
    %c0_30 = arith.constant 0 : index
    %49 = vector.load %arg10[%c0_29, %c0_30] : memref<32x128xf32, #tpu.memory_space<vmem>>, vector<32x128xf32>
    %cst_31 = arith.constant dense<0.000000e+00> : vector<256x128xf32>
    %50 = tpu.matmul %41, %49, %cst_31 {dimension_numbers = #tpu.dot_dimension_numbers<[1], [0], [0], [1], [0, 0, 1, 1], [], []>} : vector<256x32xf32>, vector<32x128xf32>, vector<256x128xf32> -> vector<256x128xf32>
    %51 = arith.addf %48, %50 : vector<256x128xf32>
    %c0_32 = arith.constant 0 : index
    %c0_33 = arith.constant 0 : index
    %52 = vector.load %arg11[%c0_32, %c0_33] : memref<1x128xf32, #tpu.memory_space<vmem>>, vector<1x128xf32>
    %53 = vector.broadcast %52 : vector<1x128xf32> to vector<256x128xf32>
    %54 = arith.addf %51, %53 : vector<256x128xf32>
    %c0_34 = arith.constant 0 : index
    %c0_35 = arith.constant 0 : index
    %55 = vector.load %arg12[%c0_34, %c0_35] : memref<256x128xf32, #tpu.memory_space<vmem>>, vector<256x128xf32>
    tpu.vector_store %arg12[%c0_34, %c0_35], %54 {strides = array<i32>} : memref<256x128xf32, #tpu.memory_space<vmem>>, vector<256x128xf32>,
    return
  }
  func.func @transform_0(%arg0: i32) -> (i32, i32) {
    %c0_i32 = arith.constant 0 : i32
    %c0_i32_0 = arith.constant 0 : i32
    return %arg0, %c0_i32 : i32, i32
  }
  func.func @transform_1(%arg0: i32) -> (i32, i32) {
    %c0_i32 = arith.constant 0 : i32
    %c0_i32_0 = arith.constant 0 : i32
    return %arg0, %c0_i32 : i32, i32
  }
  func.func @transform_2(%arg0: i32) -> (i32, i32) {
    %c0_i32 = arith.constant 0 : i32
    %c0_i32_0 = arith.constant 0 : i32
    %c0_i32_1 = arith.constant 0 : i32
    return %c0_i32, %c0_i32_0 : i32, i32
  }
  func.func @transform_3(%arg0: i32) -> (i32, i32) {
    %c0_i32 = arith.constant 0 : i32
    %c0_i32_0 = arith.constant 0 : i32
    %c0_i32_1 = arith.constant 0 : i32
    return %c0_i32, %c0_i32_0 : i32, i32
  }
  func.func @transform_4(%arg0: i32) -> (i32, i32) {
    %c0_i32 = arith.constant 0 : i32
    %c0_i32_0 = arith.constant 0 : i32
    %c0_i32_1 = arith.constant 0 : i32
    return %c0_i32, %c0_i32_0 : i32, i32
  }
  func.func @transform_5(%arg0: i32) -> (i32, i32) {
    %c0_i32 = arith.constant 0 : i32
    %c0_i32_0 = arith.constant 0 : i32
    %c0_i32_1 = arith.constant 0 : i32
    return %c0_i32, %c0_i32_0 : i32, i32
  }
  func.func @transform_6(%arg0: i32) -> (i32, i32) {
    %c0_i32 = arith.constant 0 : i32
    %c0_i32_0 = arith.constant 0 : i32
    %c0_i32_1 = arith.constant 0 : i32
    return %c0_i32, %c0_i32_0 : i32, i32
  }
  func.func @transform_7(%arg0: i32) -> (i32, i32) {
    %c0_i32 = arith.constant 0 : i32
    %c0_i32_0 = arith.constant 0 : i32
    %c0_i32_1 = arith.constant 0 : i32
    return %c0_i32, %c0_i32_0 : i32, i32
  }
  func.func @transform_8(%arg0: i32) -> (i32, i32) {
    %c0_i32 = arith.constant 0 : i32
    %c0_i32_0 = arith.constant 0 : i32
    %c0_i32_1 = arith.constant 0 : i32
    return %c0_i32, %c0_i32_0 : i32, i32
  }
  func.func @transform_9(%arg0: i32) -> (i32, i32) {
    %c0_i32 = arith.constant 0 : i32
    %c0_i32_0 = arith.constant 0 : i32
    %c0_i32_1 = arith.constant 0 : i32
    return %c0_i32, %c0_i32_0 : i32, i32
  }
  func.func @transform_10(%arg0: i32) -> (i32, i32) {
    %c0_i32 = arith.constant 0 : i32
    %c0_i32_0 = arith.constant 0 : i32
    %c0_i32_1 = arith.constant 0 : i32
    return %c0_i32, %c0_i32_0 : i32, i32
  }
  func.func @transform_11(%arg0: i32) -> (i32, i32) {
    %c0_i32 = arith.constant 0 : i32
    %c0_i32_0 = arith.constant 0 : i32
    return %arg0, %c0_i32 : i32, i32
  }
}

</mosaic_0001>

<llo_original>
// kernel: vit_eraser_segmim_forward.1
$region0: #{vit_eraser_segmim_forward.1}
  #allocation0 [shape = 'u32[]', space=smem, size = 0x4, offset = 0x4, fixed_abs, tag = 'smem constant byte address 0x4 - core index']
  #allocation1 [shape = 'u32[72,128]{1,0:T(1,128)}', space=vmem, size = 0x9000, scoped, tag = 'internal scratch']
  %s0 = inlined_call_operand.vmem [shape: f32[512,4], index: 0, kind: input, shape index: {}]
  %s1 = inlined_call_operand.vmem [shape: f32[512,1], index: 1, kind: input, shape index: {}]
  %s2 = inlined_call_operand.vmem [shape: f32[4,16], index: 2, kind: input, shape index: {}]
  %s3 = inlined_call_operand.vmem [shape: f32[1,16], index: 3, kind: input, shape index: {}]
  %s4 = inlined_call_operand.vmem [shape: f32[16,32], index: 4, kind: input, shape index: {}]
  %s5 = inlined_call_operand.vmem [shape: f32[1,32], index: 5, kind: input, shape index: {}]
  %s6 = inlined_call_operand.vmem [shape: f32[32,16], index: 6, kind: input, shape index: {}]
  %s7 = inlined_call_operand.vmem [shape: f32[1,16], index: 7, kind: input, shape index: {}]
  %s8 = inlined_call_operand.vmem [shape: f32[16,128], index: 8, kind: input, shape index: {}]
  %s9 = inlined_call_operand.vmem [shape: f32[32,128], index: 9, kind: input, shape index: {}]
  %s10 = inlined_call_operand.vmem [shape: f32[1,128], index: 10, kind: input, shape index: {}]
  %s11 = inlined_call_operand.vmem [shape: f32[512,128], index: 11, kind: output, shape index: {}]
  %s12 = sld [smem:[#allocation0]]
  $region77: #{vit_eraser_segmim_forward.1} parent=0
    _
  %s14 = ssub.s32 1, %s12
  %s15 = scalar_select 0, %s14, %s12
  loop: start=0, step=1, limit=4
  $region2: #{vit_eraser_segmim_forward.1} parent=0 // loop_pre_header
    _
  $region3: #{vit_eraser_segmim_forward.1} parent=0 // loop_header
    %s17 = sphi 0, %s21
    %p18 = scmp.ge.s32.totalorder %s17, 4
    %s27 = sphi 0, %s29
    %s30 = sphi 0, %s27
    %s31 = sphi 0, %s30
    %s47 = sphi 0, %s31
    %s53 = sphi 0, %s55
    %s56 = sphi 0, %s53
    %s57 = sphi 0, %s56
    %s73 = sphi 0, %s57
    %s77 = sphi 0, %s77
    %s79 = sphi 0, %s77
    %s80 = sphi 0, %s79
    %s94 = sphi 0, %s80
    %s98 = sphi 0, %s98
    %s100 = sphi 0, %s98
    %s101 = sphi 0, %s100
    %s115 = sphi 0, %s101
    %s119 = sphi 0, %s119
    %s121 = sphi 0, %s119
    %s122 = sphi 0, %s121
    %s136 = sphi 0, %s122
    %s140 = sphi 0, %s140
    %s142 = sphi 0, %s140
    %s143 = sphi 0, %s142
    %s157 = sphi 0, %s143
    %s161 = sphi 0, %s161
    %s163 = sphi 0, %s161
    %s164 = sphi 0, %s163
    %s178 = sphi 0, %s164
    %s182 = sphi 0, %s182
    %s184 = sphi 0, %s182
    %s185 = sphi 0, %s184
    %s199 = sphi 0, %s185
    %s203 = sphi 0, %s203
    %s205 = sphi 0, %s203
    %s206 = sphi 0, %s205
    %s220 = sphi 0, %s206
    %s224 = sphi 0, %s224
    %s226 = sphi 0, %s224
    %s227 = sphi 0, %s226
    %s241 = sphi 0, %s227
    %s245 = sphi 0, %s245
    %s247 = sphi 0, %s245
    %s248 = sphi 0, %s247
    %s262 = sphi 0, %s248
    %s268 = sphi 0, %s270
    %s271 = sphi 0, %s268
    %s272 = sphi 0, %s271
    %s288 = sphi 0, %s272
  $region4: #{vit_eraser_segmim_forward.1} parent=0 // loop_header_branch
    %20 = sbr.rel (%p18) target = $region8
  $region5: #{vit_eraser_segmim_forward.1} parent=0 // loop_body
    %s22 = ssub.s32 %s17, 1
    %s23 = ssub.s32 %s17, 2
    %s24 = sadd.s32 %s17, 1
    %s25 = ssub.s32 %s17, %s24
    %p26 = scmp.eq.s32.totalorder %s25, 0
    %s28 = sadd.s32 %s27, 1
    %s29 = scalar_select %p26, %s27, %s28
    %p32 = pneg %p26
    %p33 = scmp.eq.s32.totalorder %s17, 1
    %p34 = por %p32, %p33
    %p35 = scmp.ne.s32.totalorder %s27, %s30
    %p36 = scmp.eq.s32.totalorder %s17, 0
    %p37 = por %p35, %p36
    %p38 = scmp.ne.s32.totalorder %s27, %s30
    %p39 = scmp.eq.s32.totalorder %s22, 1
    %p40 = por %p38, %p39
    %p41 = scmp.ne.s32.totalorder %s30, %s31
    %p42 = scmp.eq.s32.totalorder %s22, 0
    %p43 = por %p41, %p42
    %p44 = scmp.ne.s32.totalorder %s30, %s31
    %p45 = scmp.eq.s32.totalorder %s23, 1
    %p46 = por %p44, %p45
    %p48 = scmp.ne.s32.totalorder %s31, %s47
    %p49 = scmp.eq.s32.totalorder %s23, 0
    %p50 = por %p48, %p49
    %s51 = ssub.s32 %s17, %s24
    %p52 = scmp.eq.s32.totalorder %s51, 0
    %s54 = sadd.s32 %s53, 1
    %s55 = scalar_select %p52, %s53, %s54
    %p58 = pneg %p52
    %p59 = scmp.eq.s32.totalorder %s17, 1
    %p60 = por %p58, %p59
    %p61 = scmp.ne.s32.totalorder %s53, %s56
    %p62 = scmp.eq.s32.totalorder %s17, 0
    %p63 = por %p61, %p62
    %p64 = scmp.ne.s32.totalorder %s53, %s56
    %p65 = scmp.eq.s32.totalorder %s22, 1
    %p66 = por %p64, %p65
    %p67 = scmp.ne.s32.totalorder %s56, %s57
    %p68 = scmp.eq.s32.totalorder %s22, 0
    %p69 = por %p67, %p68
    %p70 = scmp.ne.s32.totalorder %s56, %s57
    %p71 = scmp.eq.s32.totalorder %s23, 1
    %p72 = por %p70, %p71
    %p74 = scmp.ne.s32.totalorder %s57, %s73
    %p75 = scmp.eq.s32.totalorder %s23, 0
    %p76 = por %p74, %p75
    %s78 = sadd.s32 %s77, 1
    %p81 = scmp.eq.s32.totalorder %s17, 1
    %p82 = scmp.ne.s32.totalorder %s77, %s79
    %p83 = scmp.eq.s32.totalorder %s17, 0
    %p84 = por %p82, %p83
    %p85 = scmp.ne.s32.totalorder %s77, %s79
    %p86 = scmp.eq.s32.totalorder %s22, 1
    %p87 = por %p85, %p86
    %p88 = scmp.ne.s32.totalorder %s79, %s80
    %p89 = scmp.eq.s32.totalorder %s22, 0
    %p90 = por %p88, %p89
    %p91 = scmp.ne.s32.totalorder %s79, %s80
    %p92 = scmp.eq.s32.totalorder %s23, 1
    %p93 = por %p91, %p92
    %p95 = scmp.ne.s32.totalorder %s80, %s94
    %p96 = scmp.eq.s32.totalorder %s23, 0
    %p97 = por %p95, %p96
    %s99 = sadd.s32 %s98, 1
    %p102 = scmp.eq.s32.totalorder %s17, 1
    %p103 = scmp.ne.s32.totalorder %s98, %s100
    %p104 = scmp.eq.s32.totalorder %s17, 0
    %p105 = por %p103, %p104
    %p106 = scmp.ne.s32.totalorder %s98, %s100
    %p107 = scmp.eq.s32.totalorder %s22, 1
    %p108 = por %p106, %p107
    %p109 = scmp.ne.s32.totalorder %s100, %s101
    %p110 = scmp.eq.s32.totalorder %s22, 0
    %p111 = por %p109, %p110
    %p112 = scmp.ne.s32.totalorder %s100, %s101
    %p113 = scmp.eq.s32.totalorder %s23, 1
    %p114 = por %p112, %p113
    %p116 = scmp.ne.s32.totalorder %s101, %s115
    %p117 = scmp.eq.s32.totalorder %s23, 0
    %p118 = por %p116, %p117
    %s120 = sadd.s32 %s119, 1
    %p123 = scmp.eq.s32.totalorder %s17, 1
    %p124 = scmp.ne.s32.totalorder %s119, %s121
    %p125 = scmp.eq.s32.totalorder %s17, 0
    %p126 = por %p124, %p125
    %p127 = scmp.ne.s32.totalorder %s119, %s121
    %p128 = scmp.eq.s32.totalorder %s22, 1
    %p129 = por %p127, %p128
    %p130 = scmp.ne.s32.totalorder %s121, %s122
    %p131 = scmp.eq.s32.totalorder %s22, 0
    %p132 = por %p130, %p131
    %p133 = scmp.ne.s32.totalorder %s121, %s122
    %p134 = scmp.eq.s32.totalorder %s23, 1
    %p135 = por %p133, %p134
    %p137 = scmp.ne.s32.totalorder %s122, %s136
    %p138 = scmp.eq.s32.totalorder %s23, 0
    %p139 = por %p137, %p138
    %s141 = sadd.s32 %s140, 1
    %p144 = scmp.eq.s32.totalorder %s17, 1
    %p145 = scmp.ne.s32.totalorder %s140, %s142
    %p146 = scmp.eq.s32.totalorder %s17, 0
    %p147 = por %p145, %p146
    %p148 = scmp.ne.s32.totalorder %s140, %s142
    %p149 = scmp.eq.s32.totalorder %s22, 1
    %p150 = por %p148, %p149
    %p151 = scmp.ne.s32.totalorder %s142, %s143
    %p152 = scmp.eq.s32.totalorder %s22, 0
    %p153 = por %p151, %p152
    %p154 = scmp.ne.s32.totalorder %s142, %s143
    %p155 = scmp.eq.s32.totalorder %s23, 1
    %p156 = por %p154, %p155
    %p158 = scmp.ne.s32.totalorder %s143, %s157
    %p159 = scmp.eq.s32.totalorder %s23, 0
    %p160 = por %p158, %p159
    %s162 = sadd.s32 %s161, 1
    %p165 = scmp.eq.s32.totalorder %s17, 1
    %p166 = scmp.ne.s32.totalorder %s161, %s163
    %p167 = scmp.eq.s32.totalorder %s17, 0
    %p168 = por %p166, %p167
    %p169 = scmp.ne.s32.totalorder %s161, %s163
    %p170 = scmp.eq.s32.totalorder %s22, 1
    %p171 = por %p169, %p170
    %p172 = scmp.ne.s32.totalorder %s163, %s164
    %p173 = scmp.eq.s32.totalorder %s22, 0
    %p174 = por %p172, %p173
    %p175 = scmp.ne.s32.totalorder %s163, %s164
    %p176 = scmp.eq.s32.totalorder %s23, 1
    %p177 = por %p175, %p176
    %p179 = scmp.ne.s32.totalorder %s164, %s178
    %p180 = scmp.eq.s32.totalorder %s23, 0
    %p181 = por %p179, %p180
    %s183 = sadd.s32 %s182, 1
    %p186 = scmp.eq.s32.totalorder %s17, 1
    %p187 = scmp.ne.s32.totalorder %s182, %s184
    %p188 = scmp.eq.s32.totalorder %s17, 0
    %p189 = por %p187, %p188
    %p190 = scmp.ne.s32.totalorder %s182, %s184
    %p191 = scmp.eq.s32.totalorder %s22, 1
    %p192 = por %p190, %p191
    %p193 = scmp.ne.s32.totalorder %s184, %s185
    %p194 = scmp.eq.s32.totalorder %s22, 0
    %p195 = por %p193, %p194
    %p196 = scmp.ne.s32.totalorder %s184, %s185
    %p197 = scmp.eq.s32.totalorder %s23, 1
    %p198 = por %p196, %p197
    %p200 = scmp.ne.s32.totalorder %s185, %s199
    %p201 = scmp.eq.s32.totalorder %s23, 0
    %p202 = por %p200, %p201
    %s204 = sadd.s32 %s203, 1
    %p207 = scmp.eq.s32.totalorder %s17, 1
    %p208 = scmp.ne.s32.totalorder %s203, %s205
    %p209 = scmp.eq.s32.totalorder %s17, 0
    %p210 = por %p208, %p209
    %p211 = scmp.ne.s32.totalorder %s203, %s205
    %p212 = scmp.eq.s32.totalorder %s22, 1
    %p213 = por %p211, %p212
    %p214 = scmp.ne.s32.totalorder %s205, %s206
    %p215 = scmp.eq.s32.totalorder %s22, 0
    %p216 = por %p214, %p215
    %p217 = scmp.ne.s32.totalorder %s205, %s206
    %p218 = scmp.eq.s32.totalorder %s23, 1
    %p219 = por %p217, %p218
    %p221 = scmp.ne.s32.totalorder %s206, %s220
    %p222 = scmp.eq.s32.totalorder %s23, 0
    %p223 = por %p221, %p222
    %s225 = sadd.s32 %s224, 1
    %p228 = scmp.eq.s32.totalorder %s17, 1
    %p229 = scmp.ne.s32.totalorder %s224, %s226
    %p230 = scmp.eq.s32.totalorder %s17, 0
    %p231 = por %p229, %p230
    %p232 = scmp.ne.s32.totalorder %s224, %s226
    %p233 = scmp.eq.s32.totalorder %s22, 1
    %p234 = por %p232, %p233
    %p235 = scmp.ne.s32.totalorder %s226, %s227
    %p236 = scmp.eq.s32.totalorder %s22, 0
    %p237 = por %p235, %p236
    %p238 = scmp.ne.s32.totalorder %s226, %s227
    %p239 = scmp.eq.s32.totalorder %s23, 1
    %p240 = por %p238, %p239
    %p242 = scmp.ne.s32.totalorder %s227, %s241
    %p243 = scmp.eq.s32.totalorder %s23, 0
    %p244 = por %p242, %p243
    %s246 = sadd.s32 %s245, 1
    %p249 = scmp.eq.s32.totalorder %s17, 1
    %p250 = scmp.ne.s32.totalorder %s245, %s247
    %p251 = scmp.eq.s32.totalorder %s17, 0
    %p252 = por %p250, %p251
    %p253 = scmp.ne.s32.totalorder %s245, %s247
    %p254 = scmp.eq.s32.totalorder %s22, 1
    %p255 = por %p253, %p254
    %p256 = scmp.ne.s32.totalorder %s247, %s248
    %p257 = scmp.eq.s32.totalorder %s22, 0
    %p258 = por %p256, %p257
    %p259 = scmp.ne.s32.totalorder %s247, %s248
    %p260 = scmp.eq.s32.totalorder %s23, 1
    %p261 = por %p259, %p260
    %p263 = scmp.ne.s32.totalorder %s248, %s262
    %p264 = scmp.eq.s32.totalorder %s23, 0
    %p265 = por %p263, %p264
    %s266 = ssub.s32 %s17, %s24
    %p267 = scmp.eq.s32.totalorder %s266, 0
    %s269 = sadd.s32 %s268, 1
    %s270 = scalar_select %p267, %s268, %s269
    %p273 = pneg %p267
    %p274 = scmp.eq.s32.totalorder %s17, 1
    %p275 = por %p273, %p274
    %p276 = scmp.ne.s32.totalorder %s268, %s271
    %p277 = scmp.eq.s32.totalorder %s17, 0
    %p278 = por %p276, %p277
    %p279 = scmp.ne.s32.totalorder %s268, %s271
    %p280 = scmp.eq.s32.totalorder %s22, 1
    %p281 = por %p279, %p280
    %p282 = scmp.ne.s32.totalorder %s271, %s272
    %p283 = scmp.eq.s32.totalorder %s22, 0
    %p284 = por %p282, %p283
    %p285 = scmp.ne.s32.totalorder %s271, %s272
    %p286 = scmp.eq.s32.totalorder %s23, 1
    %p287 = por %p285, %p286
    %p289 = scmp.ne.s32.totalorder %s272, %s288
    %p290 = scmp.eq.s32.totalorder %s23, 0
    %p291 = por %p289, %p290
    %p292 = scmp.le.s32.totalorder 1, %s17
    %p293 = scmp.lt.s32.totalorder %s17, 3
    %p294 = pnand %p292, %p293
    %p295 = pneg %p294
    // Predicated region
    $region9: #{vit_eraser_segmim_forward.1} parent=5 // pred_check
      _
    $region10: #{vit_eraser_segmim_forward.1} parent=5 // pred_check_branch
      %297 = sbr.rel (%p294) target = $region12
    $region11: #{vit_eraser_segmim_forward.1} parent=5 // pred_region
      %s298 = ssub.s32 %s17, 1
      // Predicated region
      $region13: #{vit_eraser_segmim_forward.1} parent=11 // pred_check
        %p299 = pneg %p90
      $region14: #{vit_eraser_segmim_forward.1} parent=11 // pred_check_branch
        %301 = sbr.rel (%p299) target = $region16
      $region15: #{vit_eraser_segmim_forward.1} parent=11 // pred_region
        _
      $region16: #{vit_eraser_segmim_forward.1} parent=11 // pred_fallthru
        _
      // Predicated region
      $region17: #{vit_eraser_segmim_forward.1} parent=11 // pred_check
        %p302 = pneg %p111
      $region18: #{vit_eraser_segmim_forward.1} parent=11 // pred_check_branch
        %304 = sbr.rel (%p302) target = $region20
      $region19: #{vit_eraser_segmim_forward.1} parent=11 // pred_region
        _
      $region20: #{vit_eraser_segmim_forward.1} parent=11 // pred_fallthru
        _
      // Predicated region
      $region21: #{vit_eraser_segmim_forward.1} parent=11 // pred_check
        %p305 = pneg %p132
      $region22: #{vit_eraser_segmim_forward.1} parent=11 // pred_check_branch
        %307 = sbr.rel (%p305) target = $region24
      $region23: #{vit_eraser_segmim_forward.1} parent=11 // pred_region
        _
      $region24: #{vit_eraser_segmim_forward.1} parent=11 // pred_fallthru
        _
      // Predicated region
      $region25: #{vit_eraser_segmim_forward.1} parent=11 // pred_check
        %p308 = pneg %p153
      $region26: #{vit_eraser_segmim_forward.1} parent=11 // pred_check_branch
        %310 = sbr.rel (%p308) target = $region28
      $region27: #{vit_eraser_segmim_forward.1} parent=11 // pred_region
        _
      $region28: #{vit_eraser_segmim_forward.1} parent=11 // pred_fallthru
        _
      // Predicated region
      $region29: #{vit_eraser_segmim_forward.1} parent=11 // pred_check
        %p311 = pneg %p174
      $region30: #{vit_eraser_segmim_forward.1} parent=11 // pred_check_branch
        %313 = sbr.rel (%p311) target = $region32
      $region31: #{vit_eraser_segmim_forward.1} parent=11 // pred_region
        _
      $region32: #{vit_eraser_segmim_forward.1} parent=11 // pred_fallthru
        _
      // Predicated region
      $region33: #{vit_eraser_segmim_forward.1} parent=11 // pred_check
        %p314 = pneg %p195
      $region34: #{vit_eraser_segmim_forward.1} parent=11 // pred_check_branch
        %316 = sbr.rel (%p314) target = $region36
      $region35: #{vit_eraser_segmim_forward.1} parent=11 // pred_region
        _
      $region36: #{vit_eraser_segmim_forward.1} parent=11 // pred_fallthru
        _
      // Predicated region
      $region37: #{vit_eraser_segmim_forward.1} parent=11 // pred_check
        %p317 = pneg %p216
      $region38: #{vit_eraser_segmim_forward.1} parent=11 // pred_check_branch
        %319 = sbr.rel (%p317) target = $region40
      $region39: #{vit_eraser_segmim_forward.1} parent=11 // pred_region
        _
      $region40: #{vit_eraser_segmim_forward.1} parent=11 // pred_fallthru
        _
      // Predicated region
      $region41: #{vit_eraser_segmim_forward.1} parent=11 // pred_check
        %p320 = pneg %p237
      $region42: #{vit_eraser_segmim_forward.1} parent=11 // pred_check_branch
        %322 = sbr.rel (%p320) target = $region44
      $region43: #{vit_eraser_segmim_forward.1} parent=11 // pred_region
        _
      $region44: #{vit_eraser_segmim_forward.1} parent=11 // pred_fallthru
        _
      // Predicated region
      $region45: #{vit_eraser_segmim_forward.1} parent=11 // pred_check
        %p323 = pneg %p258
      $region46: #{vit_eraser_segmim_forward.1} parent=11 // pred_check_branch
        %325 = sbr.rel (%p323) target = $region48
      $region47: #{vit_eraser_segmim_forward.1} parent=11 // pred_region
        _
      $region48: #{vit_eraser_segmim_forward.1} parent=11 // pred_fallthru
        _
    $region12: #{vit_eraser_segmim_forward.1} parent=5 // pred_fallthru
      _
    %p326 = scmp.lt.s32.totalorder %s17, 2
    // Predicated region
    $region49: #{vit_eraser_segmim_forward.1} parent=5 // pred_check
      %p327 = pneg %p326
    $region50: #{vit_eraser_segmim_forward.1} parent=5 // pred_check_branch
      %329 = sbr.rel (%p327) target = $region52
    $region51: #{vit_eraser_segmim_forward.1} parent=5 // pred_region
      // Predicated region
      $region53: #{vit_eraser_segmim_forward.1} parent=51 // pred_check
        %p330 = pneg %p37
      $region54: #{vit_eraser_segmim_forward.1} parent=51 // pred_check_branch
        %332 = sbr.rel (%p330) target = $region56
      $region55: #{vit_eraser_segmim_forward.1} parent=51 // pred_region
        %s333 = smul.u32 32, %s17
        %p334 = scmp.lt.s32.totalorder %s333, 63
        %s335 = scalar_select %p334, %s333, 63
        %s336 = smul.addr %s335, 8
        %s337 = scalar_lea.vmem %s0, %s336
        %s338 = smul.u32 32, %s17
      $region56: #{vit_eraser_segmim_forward.1} parent=51 // pred_fallthru
        _
      // Predicated region
      $region57: #{vit_eraser_segmim_forward.1} parent=51 // pred_check
        %p339 = pneg %p63
      $region58: #{vit_eraser_segmim_forward.1} parent=51 // pred_check_branch
        %341 = sbr.rel (%p339) target = $region60
      $region59: #{vit_eraser_segmim_forward.1} parent=51 // pred_region
        %s342 = smul.u32 32, %s17
        %p343 = scmp.lt.s32.totalorder %s342, 63
        %s344 = scalar_select %p343, %s342, 63
        %s345 = smul.addr %s344, 8
        %s346 = scalar_lea.vmem %s1, %s345
        %s347 = smul.u32 32, %s17
      $region60: #{vit_eraser_segmim_forward.1} parent=51 // pred_fallthru
        _
    $region52: #{vit_eraser_segmim_forward.1} parent=5 // pred_fallthru
      _
    %p348 = scmp.le.s32.totalorder 1, %s17
    %p349 = scmp.lt.s32.totalorder %s17, 3
    %p350 = pnand %p348, %p349
    %p351 = pneg %p350
    // Predicated region
    $region61: #{vit_eraser_segmim_forward.1} parent=5 // pred_check
      _
    $region62: #{vit_eraser_segmim_forward.1} parent=5 // pred_check_branch
      %353 = sbr.rel (%p350) target = $region64
    $region63: #{vit_eraser_segmim_forward.1} parent=5 // pred_region
      %s354 = ssub.s32 %s17, 1
      %s355 = smul.u32 32, %s22
      %p356 = scmp.lt.s32.totalorder %s355, 63
      %s357 = scalar_select %p356, %s355, 63
      %s358 = smul.addr %s357, 8
      %s359 = scalar_lea.vmem %s0, %s358
      %p360 = pneg %p43
      %p361 = pneg %p40
      %s362 = smul.u32 32, %s22
      %p363 = scmp.lt.s32.totalorder %s362, 63
      %s364 = scalar_select %p363, %s362, 63
      %s365 = smul.addr %s364, 8
      %s366 = scalar_lea.vmem %s1, %s365
      %p367 = pneg %p69
      %p368 = pneg %p66
      %p369 = pneg %p90
      %p370 = pneg %p87
      %p371 = pneg %p111
      %p372 = pneg %p108
      %p373 = pneg %p132
      %p374 = pneg %p129
      %p375 = pneg %p153
      %p376 = pneg %p150
      %p377 = pneg %p174
      %p378 = pneg %p171
      %p379 = pneg %p195
      %p380 = pneg %p192
      %p381 = pneg %p216
      %p382 = pneg %p213
      %p383 = pneg %p237
      %p384 = pneg %p234
      %p385 = pneg %p258
      %p386 = pneg %p255
      %p387 = pneg %p284
      %p388 = pneg %p281
      %s389 = smul.u32 32, %s22
      %p390 = scmp.lt.s32.totalorder %s389, 63
      %s391 = scalar_select %p390, %s389, 63
      %s392 = smul.addr %s391, 8
      %s393 = scalar_lea.vmem %s11, %s392
      %s394 = smul.u32 32, %s22
      %p395 = scmp.lt.s32.totalorder %s394, 63
      %s396 = scalar_select %p395, %s394, 63
      %s397 = smul.addr %s396, 8
      %s398 = scalar_lea.vmem %s0, %s397
      %s399 = smul.u32 32, %s22
      %s400 = smul.u32 32, %s22
      %p401 = scmp.lt.s32.totalorder %s400, 63
      %s402 = scalar_select %p401, %s400, 63
      %s403 = smul.addr %s402, 8
      %s404 = scalar_lea.vmem %s1, %s403
      %s405 = smul.u32 32, %s22
      %s406 = smul.u32 32, %s22
      %p407 = scmp.lt.s32.totalorder %s406, 63
      %s408 = scalar_select %p407, %s406, 63
      %s409 = smul.addr %s408, 8
      %s410 = scalar_lea.vmem %s11, %s409
      %s411 = smul.u32 32, %s22
      %v412 = vld [vmem:[%s398] sm:$0xff]
      %v413 = vld [vmem:[%s398 + $0x8] sm:$0xff]
      %v414 = vld [vmem:[%s398 + $0x10] sm:$0xff]
      %v415 = vld [vmem:[%s398 + $0x18] sm:$0xff]
      %v416 = vld [vmem:[%s398 + $0x20] sm:$0xff]
      %v417 = vld [vmem:[%s398 + $0x28] sm:$0xff]
      %v418 = vld [vmem:[%s398 + $0x30] sm:$0xff]
      %v419 = vld [vmem:[%s398 + $0x38] sm:$0xff]
      %v420 = vld [vmem:[%s398 + $0x40] sm:$0xff]
      %v421 = vld [vmem:[%s398 + $0x48] sm:$0xff]
      %v422 = vld [vmem:[%s398 + $0x50] sm:$0xff]
      %v423 = vld [vmem:[%s398 + $0x58] sm:$0xff]
      %v424 = vld [vmem:[%s398 + $0x60] sm:$0xff]
      %v425 = vld [vmem:[%s398 + $0x68] sm:$0xff]
      %v426 = vld [vmem:[%s398 + $0x70] sm:$0xff]
      %v427 = vld [vmem:[%s398 + $0x78] sm:$0xff]
      %v428 = vld [vmem:[%s398 + $0x80] sm:$0xff]
      %v429 = vld [vmem:[%s398 + $0x88] sm:$0xff]
      %v430 = vld [vmem:[%s398 + $0x90] sm:$0xff]
      %v431 = vld [vmem:[%s398 + $0x98] sm:$0xff]
      %v432 = vld [vmem:[%s398 + $0xa0] sm:$0xff]
      %v433 = vld [vmem:[%s398 + $0xa8] sm:$0xff]
      %v434 = vld [vmem:[%s398 + $0xb0] sm:$0xff]
      %v435 = vld [vmem:[%s398 + $0xb8] sm:$0xff]
      %v436 = vld [vmem:[%s398 + $0xc0] sm:$0xff]
      %v437 = vld [vmem:[%s398 + $0xc8] sm:$0xff]
      %v438 = vld [vmem:[%s398 + $0xd0] sm:$0xff]
      %v439 = vld [vmem:[%s398 + $0xd8] sm:$0xff]
      %v440 = vld [vmem:[%s398 + $0xe0] sm:$0xff]
      %v441 = vld [vmem:[%s398 + $0xe8] sm:$0xff]
      %v442 = vld [vmem:[%s398 + $0xf0] sm:$0xff]
      %v443 = vld [vmem:[%s398 + $0xf8] sm:$0xff]
      %v444 = vld [vmem:[%s404] sm:$0xff]
      %v445 = vld [vmem:[%s404 + $0x8] sm:$0xff]
      %v446 = vld [vmem:[%s404 + $0x10] sm:$0xff]
      %v447 = vld [vmem:[%s404 + $0x18] sm:$0xff]
      %v448 = vld [vmem:[%s404 + $0x20] sm:$0xff]
      %v449 = vld [vmem:[%s404 + $0x28] sm:$0xff]
      %v450 = vld [vmem:[%s404 + $0x30] sm:$0xff]
      %v451 = vld [vmem:[%s404 + $0x38] sm:$0xff]
      %v452 = vld [vmem:[%s404 + $0x40] sm:$0xff]
      %v453 = vld [vmem:[%s404 + $0x48] sm:$0xff]
      %v454 = vld [vmem:[%s404 + $0x50] sm:$0xff]
      %v455 = vld [vmem:[%s404 + $0x58] sm:$0xff]
      %v456 = vld [vmem:[%s404 + $0x60] sm:$0xff]
      %v457 = vld [vmem:[%s404 + $0x68] sm:$0xff]
      %v458 = vld [vmem:[%s404 + $0x70] sm:$0xff]
      %v459 = vld [vmem:[%s404 + $0x78] sm:$0xff]
      %v460 = vld [vmem:[%s404 + $0x80] sm:$0xff]
      %v461 = vld [vmem:[%s404 + $0x88] sm:$0xff]
      %v462 = vld [vmem:[%s404 + $0x90] sm:$0xff]
      %v463 = vld [vmem:[%s404 + $0x98] sm:$0xff]
      %v464 = vld [vmem:[%s404 + $0xa0] sm:$0xff]
      %v465 = vld [vmem:[%s404 + $0xa8] sm:$0xff]
      %v466 = vld [vmem:[%s404 + $0xb0] sm:$0xff]
      %v467 = vld [vmem:[%s404 + $0xb8] sm:$0xff]
      %v468 = vld [vmem:[%s404 + $0xc0] sm:$0xff]
      %v469 = vld [vmem:[%s404 + $0xc8] sm:$0xff]
      %v470 = vld [vmem:[%s404 + $0xd0] sm:$0xff]
      %v471 = vld [vmem:[%s404 + $0xd8] sm:$0xff]
      %v472 = vld [vmem:[%s404 + $0xe0] sm:$0xff]
      %v473 = vld [vmem:[%s404 + $0xe8] sm:$0xff]
      %v474 = vld [vmem:[%s404 + $0xf0] sm:$0xff]
      %v475 = vld [vmem:[%s404 + $0xf8] sm:$0xff]
      %v476 = vsub.f32 1.0, %v444
      %v477 = vsub.f32 1.0, %v445
      %v478 = vsub.f32 1.0, %v446
      %v479 = vsub.f32 1.0, %v447
      %v480 = vsub.f32 1.0, %v448
      %v481 = vsub.f32 1.0, %v449
      %v482 = vsub.f32 1.0, %v450
      %v483 = vsub.f32 1.0, %v451
      %v484 = vsub.f32 1.0, %v452
      %v485 = vsub.f32 1.0, %v453
      %v486 = vsub.f32 1.0, %v454
      %v487 = vsub.f32 1.0, %v455
      %v488 = vsub.f32 1.0, %v456
      %v489 = vsub.f32 1.0, %v457
      %v490 = vsub.f32 1.0, %v458
      %v491 = vsub.f32 1.0, %v459
      %v492 = vsub.f32 1.0, %v460
      %v493 = vsub.f32 1.0, %v461
      %v494 = vsub.f32 1.0, %v462
      %v495 = vsub.f32 1.0, %v463
      %v496 = vsub.f32 1.0, %v464
      %v497 = vsub.f32 1.0, %v465
      %v498 = vsub.f32 1.0, %v466
      %v499 = vsub.f32 1.0, %v467
      %v500 = vsub.f32 1.0, %v468
      %v501 = vsub.f32 1.0, %v469
      %v502 = vsub.f32 1.0, %v470
      %v503 = vsub.f32 1.0, %v471
      %v504 = vsub.f32 1.0, %v472
      %v505 = vsub.f32 1.0, %v473
      %v506 = vsub.f32 1.0, %v474
      %v507 = vsub.f32 1.0, %v475
      %509 = vset.pattern.permute.xlu0 0
      %510 = vperm.xlu0 %509, %v476
      %v511 = vpop.permute.xlu0 %510
      %514 = vset.pattern.permute.xlu0 0
      %515 = vperm.xlu0 %514, %v477
      %v516 = vpop.permute.xlu0 %515
      %519 = vset.pattern.permute.xlu0 0
      %520 = vperm.xlu0 %519, %v478
      %v521 = vpop.permute.xlu0 %520
      %524 = vset.pattern.permute.xlu0 0
      %525 = vperm.xlu0 %524, %v479
      %v526 = vpop.permute.xlu0 %525
      %529 = vset.pattern.permute.xlu0 0
      %530 = vperm.xlu0 %529, %v480
      %v531 = vpop.permute.xlu0 %530
      %534 = vset.pattern.permute.xlu0 0
      %535 = vperm.xlu0 %534, %v481
      %v536 = vpop.permute.xlu0 %535
      %539 = vset.pattern.permute.xlu0 0
      %540 = vperm.xlu0 %539, %v482
      %v541 = vpop.permute.xlu0 %540
      %544 = vset.pattern.permute.xlu0 0
      %545 = vperm.xlu0 %544, %v483
      %v546 = vpop.permute.xlu0 %545
      %549 = vset.pattern.permute.xlu0 0
      %550 = vperm.xlu0 %549, %v484
      %v551 = vpop.permute.xlu0 %550
      %554 = vset.pattern.permute.xlu0 0
      %555 = vperm.xlu0 %554, %v485
      %v556 = vpop.permute.xlu0 %555
      %559 = vset.pattern.permute.xlu0 0
      %560 = vperm.xlu0 %559, %v486
      %v561 = vpop.permute.xlu0 %560
      %564 = vset.pattern.permute.xlu0 0
      %565 = vperm.xlu0 %564, %v487
      %v566 = vpop.permute.xlu0 %565
      %569 = vset.pattern.permute.xlu0 0
      %570 = vperm.xlu0 %569, %v488
      %v571 = vpop.permute.xlu0 %570
      %574 = vset.pattern.permute.xlu0 0
      %575 = vperm.xlu0 %574, %v489
      %v576 = vpop.permute.xlu0 %575
      %579 = vset.pattern.permute.xlu0 0
      %580 = vperm.xlu0 %579, %v490
      %v581 = vpop.permute.xlu0 %580
      %584 = vset.pattern.permute.xlu0 0
      %585 = vperm.xlu0 %584, %v491
      %v586 = vpop.permute.xlu0 %585
      %589 = vset.pattern.permute.xlu0 0
      %590 = vperm.xlu0 %589, %v492
      %v591 = vpop.permute.xlu0 %590
      %594 = vset.pattern.permute.xlu0 0
      %595 = vperm.xlu0 %594, %v493
      %v596 = vpop.permute.xlu0 %595
      %599 = vset.pattern.permute.xlu0 0
      %600 = vperm.xlu0 %599, %v494
      %v601 = vpop.permute.xlu0 %600
      %604 = vset.pattern.permute.xlu0 0
      %605 = vperm.xlu0 %604, %v495
      %v606 = vpop.permute.xlu0 %605
      %609 = vset.pattern.permute.xlu0 0
      %610 = vperm.xlu0 %609, %v496
      %v611 = vpop.permute.xlu0 %610
      %614 = vset.pattern.permute.xlu0 0
      %615 = vperm.xlu0 %614, %v497
      %v616 = vpop.permute.xlu0 %615
      %619 = vset.pattern.permute.xlu0 0
      %620 = vperm.xlu0 %619, %v498
      %v621 = vpop.permute.xlu0 %620
      %624 = vset.pattern.permute.xlu0 0
      %625 = vperm.xlu0 %624, %v499
      %v626 = vpop.permute.xlu0 %625
      %629 = vset.pattern.permute.xlu0 0
      %630 = vperm.xlu0 %629, %v500
      %v631 = vpop.permute.xlu0 %630
      %634 = vset.pattern.permute.xlu0 0
      %635 = vperm.xlu0 %634, %v501
      %v636 = vpop.permute.xlu0 %635
      %639 = vset.pattern.permute.xlu0 0
      %640 = vperm.xlu0 %639, %v502
      %v641 = vpop.permute.xlu0 %640
      %644 = vset.pattern.permute.xlu0 0
      %645 = vperm.xlu0 %644, %v503
      %v646 = vpop.permute.xlu0 %645
      %649 = vset.pattern.permute.xlu0 0
      %650 = vperm.xlu0 %649, %v504
      %v651 = vpop.permute.xlu0 %650
      %654 = vset.pattern.permute.xlu0 0
      %655 = vperm.xlu0 %654, %v505
      %v656 = vpop.permute.xlu0 %655
      %659 = vset.pattern.permute.xlu0 0
      %660 = vperm.xlu0 %659, %v506
      %v661 = vpop.permute.xlu0 %660
      %664 = vset.pattern.permute.xlu0 0
      %665 = vperm.xlu0 %664, %v507
      %v666 = vpop.permute.xlu0 %665
      %v668 = vmul.f32 %v412, %v511
      %v669 = vmul.f32 %v413, %v516
      %v670 = vmul.f32 %v414, %v521
      %v671 = vmul.f32 %v415, %v526
      %v672 = vmul.f32 %v416, %v531
      %v673 = vmul.f32 %v417, %v536
      %v674 = vmul.f32 %v418, %v541
      %v675 = vmul.f32 %v419, %v546
      %v676 = vmul.f32 %v420, %v551
      %v677 = vmul.f32 %v421, %v556
      %v678 = vmul.f32 %v422, %v561
      %v679 = vmul.f32 %v423, %v566
      %v680 = vmul.f32 %v424, %v571
      %v681 = vmul.f32 %v425, %v576
      %v682 = vmul.f32 %v426, %v581
      %v683 = vmul.f32 %v427, %v586
      %v684 = vmul.f32 %v428, %v591
      %v685 = vmul.f32 %v429, %v596
      %v686 = vmul.f32 %v430, %v601
      %v687 = vmul.f32 %v431, %v606
      %v688 = vmul.f32 %v432, %v611
      %v689 = vmul.f32 %v433, %v616
      %v690 = vmul.f32 %v434, %v621
      %v691 = vmul.f32 %v435, %v626
      %v692 = vmul.f32 %v436, %v631
      %v693 = vmul.f32 %v437, %v636
      %v694 = vmul.f32 %v438, %v641
      %v695 = vmul.f32 %v439, %v646
      %v696 = vmul.f32 %v440, %v651
      %v697 = vmul.f32 %v441, %v656
      %v698 = vmul.f32 %v442, %v661
      %v699 = vmul.f32 %v443, %v666
      %v700 = vld [vmem:[%s2] sm:$0xf]
      %v701 = vld [vmem:[%s3] sm:$0x1]
      %v703 = vperm.slane %v701, 0
      %vm705 = vcmask 31744
      %v707 = vsel %vm705, %v668, 0
      %v710 = vsel %vm705, %v669, 0
      %v713 = vsel %vm705, %v670, 0
      %v716 = vsel %vm705, %v671, 0
      %v719 = vsel %vm705, %v672, 0
      %v722 = vsel %vm705, %v673, 0
      %v725 = vsel %vm705, %v674, 0
      %v728 = vsel %vm705, %v675, 0
      %v731 = vsel %vm705, %v676, 0
      %v734 = vsel %vm705, %v677, 0
      %v737 = vsel %vm705, %v678, 0
      %v740 = vsel %vm705, %v679, 0
      %v743 = vsel %vm705, %v680, 0
      %v746 = vsel %vm705, %v681, 0
      %v749 = vsel %vm705, %v682, 0
      %v752 = vsel %vm705, %v683, 0
      %v755 = vsel %vm705, %v684, 0
      %v758 = vsel %vm705, %v685, 0
      %v761 = vsel %vm705, %v686, 0
      %v764 = vsel %vm705, %v687, 0
      %v767 = vsel %vm705, %v688, 0
      %v770 = vsel %vm705, %v689, 0
      %v773 = vsel %vm705, %v690, 0
      %v776 = vsel %vm705, %v691, 0
      %v779 = vsel %vm705, %v692, 0
      %v782 = vsel %vm705, %v693, 0
      %v785 = vsel %vm705, %v694, 0
      %v788 = vsel %vm705, %v695, 0
      %v791 = vsel %vm705, %v696, 0
      %v794 = vsel %vm705, %v697, 0
      %v797 = vsel %vm705, %v698, 0
      %v800 = vsel %vm705, %v699, 0
      %vm802 = vcmask 1043456
      %v804 = vsel %vm802, %v700, 0
      %806 = vmatpush.msra.mxu0 0.0
      %807 = vmatpush.msra.mxu0 0.0
      %808 = vmatpush.msra.mxu0 0.0
      %809 = vmatpush.msra.mxu0 0.0
      %810 = vmatpush.msra.mxu0 0.0
      %811 = vmatpush.msra.mxu0 0.0
      %812 = vmatpush.msra.mxu0 0.0
      %813 = vmatpush.msra.mxu0 0.0
      %814 = vmatpush.msra.mxu0 0.0
      %815 = vmatpush.msra.mxu0 0.0
      %816 = vmatpush.msra.mxu0 0.0
      %817 = vmatpush.msra.mxu0 0.0
      %818 = vmatpush.msra.mxu0 0.0
      %819 = vmatpush.msra.mxu0 0.0
      %820 = vmatpush.msra.mxu0 0.0
      %821 = vmatpush.msra.mxu0 %v804
      %822 = vmatmul.f32.gmra.mxu0 %v707
      %v823 = vpop.f32.mrf.mxu0
      %v824 = vadd.f32 %v703, %v823
      %825 = vmatmul.f32.gmra.mxu0 %v710
      %v826 = vpop.f32.mrf.mxu0
      %v827 = vadd.f32 %v703, %v826
      %828 = vmatmul.f32.gmra.mxu0 %v713
      %v829 = vpop.f32.mrf.mxu0
      %v830 = vadd.f32 %v703, %v829
      %831 = vmatmul.f32.gmra.mxu0 %v716
      %v832 = vpop.f32.mrf.mxu0
      %v833 = vadd.f32 %v703, %v832
      %834 = vmatmul.f32.gmra.mxu0 %v719
      %v835 = vpop.f32.mrf.mxu0
      %v836 = vadd.f32 %v703, %v835
      %837 = vmatmul.f32.gmra.mxu0 %v722
      %v838 = vpop.f32.mrf.mxu0
      %v839 = vadd.f32 %v703, %v838
      %840 = vmatmul.f32.gmra.mxu0 %v725
      %v841 = vpop.f32.mrf.mxu0
      %v842 = vadd.f32 %v703, %v841
      %843 = vmatmul.f32.gmra.mxu0 %v728
      %v844 = vpop.f32.mrf.mxu0
      %v845 = vadd.f32 %v703, %v844
      %846 = vmatmul.f32.gmra.mxu0 %v731
      %v847 = vpop.f32.mrf.mxu0
      %v848 = vadd.f32 %v703, %v847
      %849 = vmatmul.f32.gmra.mxu0 %v734
      %v850 = vpop.f32.mrf.mxu0
      %v851 = vadd.f32 %v703, %v850
      %852 = vmatmul.f32.gmra.mxu0 %v737
      %v853 = vpop.f32.mrf.mxu0
      %v854 = vadd.f32 %v703, %v853
      %855 = vmatmul.f32.gmra.mxu0 %v740
      %v856 = vpop.f32.mrf.mxu0
      %v857 = vadd.f32 %v703, %v856
      %858 = vmatmul.f32.gmra.mxu0 %v743
      %v859 = vpop.f32.mrf.mxu0
      %v860 = vadd.f32 %v703, %v859
      %861 = vmatmul.f32.gmra.mxu0 %v746
      %v862 = vpop.f32.mrf.mxu0
      %v863 = vadd.f32 %v703, %v862
      %864 = vmatmul.f32.gmra.mxu0 %v749
      %v865 = vpop.f32.mrf.mxu0
      %v866 = vadd.f32 %v703, %v865
      %867 = vmatmul.f32.gmra.mxu0 %v752
      %v868 = vpop.f32.mrf.mxu0
      %v869 = vadd.f32 %v703, %v868
      %870 = vmatmul.f32.gmra.mxu0 %v755
      %v871 = vpop.f32.mrf.mxu0
      %v872 = vadd.f32 %v703, %v871
      %873 = vmatmul.f32.gmra.mxu0 %v758
      %v874 = vpop.f32.mrf.mxu0
      %v875 = vadd.f32 %v703, %v874
      %876 = vmatmul.f32.gmra.mxu0 %v761
      %v877 = vpop.f32.mrf.mxu0
      %v878 = vadd.f32 %v703, %v877
      %879 = vmatmul.f32.gmra.mxu0 %v764
      %v880 = vpop.f32.mrf.mxu0
      %v881 = vadd.f32 %v703, %v880
      %882 = vmatmul.f32.gmra.mxu0 %v767
      %v883 = vpop.f32.mrf.mxu0
      %v884 = vadd.f32 %v703, %v883
      %885 = vmatmul.f32.gmra.mxu0 %v770
      %v886 = vpop.f32.mrf.mxu0
      %v887 = vadd.f32 %v703, %v886
      %888 = vmatmul.f32.gmra.mxu0 %v773
      %v889 = vpop.f32.mrf.mxu0
      %v890 = vadd.f32 %v703, %v889
      %891 = vmatmul.f32.gmra.mxu0 %v776
      %v892 = vpop.f32.mrf.mxu0
      %v893 = vadd.f32 %v703, %v892
      %894 = vmatmul.f32.gmra.mxu0 %v779
      %v895 = vpop.f32.mrf.mxu0
      %v896 = vadd.f32 %v703, %v895
      %897 = vmatmul.f32.gmra.mxu0 %v782
      %v898 = vpop.f32.mrf.mxu0
      %v899 = vadd.f32 %v703, %v898
      %900 = vmatmul.f32.gmra.mxu0 %v785
      %v901 = vpop.f32.mrf.mxu0
      %v902 = vadd.f32 %v703, %v901
      %903 = vmatmul.f32.gmra.mxu0 %v788
      %v904 = vpop.f32.mrf.mxu0
      %v905 = vadd.f32 %v703, %v904
      %906 = vmatmul.f32.gmra.mxu0 %v791
      %v907 = vpop.f32.mrf.mxu0
      %v908 = vadd.f32 %v703, %v907
      %909 = vmatmul.f32.gmra.mxu0 %v794
      %v910 = vpop.f32.mrf.mxu0
      %v911 = vadd.f32 %v703, %v910
      %912 = vmatmul.f32.gmra.mxu0 %v797
      %v913 = vpop.f32.mrf.mxu0
      %v914 = vadd.f32 %v703, %v913
      %915 = vmatmul.f32.gmra.mxu0 %v800
      %v916 = vpop.f32.mrf.mxu0
      %v917 = vadd.f32 %v703, %v916
      %918 = vdwg.mxu0
      %v919 = vmul.f32 %v824, %v824
      %v920 = vmul.f32 %v827, %v827
      %v921 = vmul.f32 %v830, %v830
      %v922 = vmul.f32 %v833, %v833
      %v923 = vmul.f32 %v836, %v836
      %v924 = vmul.f32 %v839, %v839
      %v925 = vmul.f32 %v842, %v842
      %v926 = vmul.f32 %v845, %v845
      %v927 = vmul.f32 %v848, %v848
      %v928 = vmul.f32 %v851, %v851
      %v929 = vmul.f32 %v854, %v854
      %v930 = vmul.f32 %v857, %v857
      %v931 = vmul.f32 %v860, %v860
      %v932 = vmul.f32 %v863, %v863
      %v933 = vmul.f32 %v866, %v866
      %v934 = vmul.f32 %v869, %v869
      %v935 = vmul.f32 %v872, %v872
      %v936 = vmul.f32 %v875, %v875
      %v937 = vmul.f32 %v878, %v878
      %v938 = vmul.f32 %v881, %v881
      %v939 = vmul.f32 %v884, %v884
      %v940 = vmul.f32 %v887, %v887
      %v941 = vmul.f32 %v890, %v890
      %v942 = vmul.f32 %v893, %v893
      %v943 = vmul.f32 %v896, %v896
      %v944 = vmul.f32 %v899, %v899
      %v945 = vmul.f32 %v902, %v902
      %v946 = vmul.f32 %v905, %v905
      %v947 = vmul.f32 %v908, %v908
      %v948 = vmul.f32 %v911, %v911
      %v949 = vmul.f32 %v914, %v914
      %v950 = vmul.f32 %v917, %v917
      %v951 = vmul.f32 %v824, %v919
      %v952 = vmul.f32 %v827, %v920
      %v953 = vmul.f32 %v830, %v921
      %v954 = vmul.f32 %v833, %v922
      %v955 = vmul.f32 %v836, %v923
      %v956 = vmul.f32 %v839, %v924
      %v957 = vmul.f32 %v842, %v925
      %v958 = vmul.f32 %v845, %v926
      %v959 = vmul.f32 %v848, %v927
      %v960 = vmul.f32 %v851, %v928
      %v961 = vmul.f32 %v854, %v929
      %v962 = vmul.f32 %v857, %v930
      %v963 = vmul.f32 %v860, %v931
      %v964 = vmul.f32 %v863, %v932
      %v965 = vmul.f32 %v866, %v933
      %v966 = vmul.f32 %v869, %v934
      %v967 = vmul.f32 %v872, %v935
      %v968 = vmul.f32 %v875, %v936
      %v969 = vmul.f32 %v878, %v937
      %v970 = vmul.f32 %v881, %v938
      %v971 = vmul.f32 %v884, %v939
      %v972 = vmul.f32 %v887, %v940
      %v973 = vmul.f32 %v890, %v941
      %v974 = vmul.f32 %v893, %v942
      %v975 = vmul.f32 %v896, %v943
      %v976 = vmul.f32 %v899, %v944
      %v977 = vmul.f32 %v902, %v945
      %v978 = vmul.f32 %v905, %v946
      %v979 = vmul.f32 %v908, %v947
      %v980 = vmul.f32 %v911, %v948
      %v981 = vmul.f32 %v914, %v949
      %v982 = vmul.f32 %v917, %v950
      %v983 = vmul.f32 %v951, 0.044715
      %v984 = vmul.f32 %v952, 0.044715
      %v985 = vmul.f32 %v953, 0.044715
      %v986 = vmul.f32 %v954, 0.044715
      %v987 = vmul.f32 %v955, 0.044715
      %v988 = vmul.f32 %v956, 0.044715
      %v989 = vmul.f32 %v957, 0.044715
      %v990 = vmul.f32 %v958, 0.044715
      %v991 = vmul.f32 %v959, 0.044715
      %v992 = vmul.f32 %v960, 0.044715
      %v993 = vmul.f32 %v961, 0.044715
      %v994 = vmul.f32 %v962, 0.044715
      %v995 = vmul.f32 %v963, 0.044715
      %v996 = vmul.f32 %v964, 0.044715
      %v997 = vmul.f32 %v965, 0.044715
      %v998 = vmul.f32 %v966, 0.044715
      %v999 = vmul.f32 %v967, 0.044715
      %v1000 = vmul.f32 %v968, 0.044715
      %v1001 = vmul.f32 %v969, 0.044715
      %v1002 = vmul.f32 %v970, 0.044715
      %v1003 = vmul.f32 %v971, 0.044715
      %v1004 = vmul.f32 %v972, 0.044715
      %v1005 = vmul.f32 %v973, 0.044715
      %v1006 = vmul.f32 %v974, 0.044715
      %v1007 = vmul.f32 %v975, 0.044715
      %v1008 = vmul.f32 %v976, 0.044715
      %v1009 = vmul.f32 %v977, 0.044715
      %v1010 = vmul.f32 %v978, 0.044715
      %v1011 = vmul.f32 %v979, 0.044715
      %v1012 = vmul.f32 %v980, 0.044715
      %v1013 = vmul.f32 %v981, 0.044715
      %v1014 = vmul.f32 %v982, 0.044715
      %v1015 = vadd.f32 %v824, %v983
      %v1016 = vadd.f32 %v827, %v984
      %v1017 = vadd.f32 %v830, %v985
      %v1018 = vadd.f32 %v833, %v986
      %v1019 = vadd.f32 %v836, %v987
      %v1020 = vadd.f32 %v839, %v988
      %v1021 = vadd.f32 %v842, %v989
      %v1022 = vadd.f32 %v845, %v990
      %v1023 = vadd.f32 %v848, %v991
      %v1024 = vadd.f32 %v851, %v992
      %v1025 = vadd.f32 %v854, %v993
      %v1026 = vadd.f32 %v857, %v994
      %v1027 = vadd.f32 %v860, %v995
      %v1028 = vadd.f32 %v863, %v996
      %v1029 = vadd.f32 %v866, %v997
      %v1030 = vadd.f32 %v869, %v998
      %v1031 = vadd.f32 %v872, %v999
      %v1032 = vadd.f32 %v875, %v1000
      %v1033 = vadd.f32 %v878, %v1001
      %v1034 = vadd.f32 %v881, %v1002
      %v1035 = vadd.f32 %v884, %v1003
      %v1036 = vadd.f32 %v887, %v1004
      %v1037 = vadd.f32 %v890, %v1005
      %v1038 = vadd.f32 %v893, %v1006
      %v1039 = vadd.f32 %v896, %v1007
      %v1040 = vadd.f32 %v899, %v1008
      %v1041 = vadd.f32 %v902, %v1009
      %v1042 = vadd.f32 %v905, %v1010
      %v1043 = vadd.f32 %v908, %v1011
      %v1044 = vadd.f32 %v911, %v1012
      %v1045 = vadd.f32 %v914, %v1013
      %v1046 = vadd.f32 %v917, %v1014
      %v1047 = vmul.f32 %v1015, 0.7978846
      %v1048 = vmul.f32 %v1016, 0.7978846
      %v1049 = vmul.f32 %v1017, 0.7978846
      %v1050 = vmul.f32 %v1018, 0.7978846
      %v1051 = vmul.f32 %v1019, 0.7978846
      %v1052 = vmul.f32 %v1020, 0.7978846
      %v1053 = vmul.f32 %v1021, 0.7978846
      %v1054 = vmul.f32 %v1022, 0.7978846
      %v1055 = vmul.f32 %v1023, 0.7978846
      %v1056 = vmul.f32 %v1024, 0.7978846
      %v1057 = vmul.f32 %v1025, 0.7978846
      %v1058 = vmul.f32 %v1026, 0.7978846
      %v1059 = vmul.f32 %v1027, 0.7978846
      %v1060 = vmul.f32 %v1028, 0.7978846
      %v1061 = vmul.f32 %v1029, 0.7978846
      %v1062 = vmul.f32 %v1030, 0.7978846
      %v1063 = vmul.f32 %v1031, 0.7978846
      %v1064 = vmul.f32 %v1032, 0.7978846
      %v1065 = vmul.f32 %v1033, 0.7978846
      %v1066 = vmul.f32 %v1034, 0.7978846
      %v1067 = vmul.f32 %v1035, 0.7978846
      %v1068 = vmul.f32 %v1036, 0.7978846
      %v1069 = vmul.f32 %v1037, 0.7978846
      %v1070 = vmul.f32 %v1038, 0.7978846
      %v1071 = vmul.f32 %v1039, 0.7978846
      %v1072 = vmul.f32 %v1040, 0.7978846
      %v1073 = vmul.f32 %v1041, 0.7978846
      %v1074 = vmul.f32 %v1042, 0.7978846
      %v1075 = vmul.f32 %v1043, 0.7978846
      %v1076 = vmul.f32 %v1044, 0.7978846
      %v1077 = vmul.f32 %v1045, 0.7978846
      %v1078 = vmul.f32 %v1046, 0.7978846
      %v1079 = vtanh.pop %v1047
      %v1080 = vtanh.pop %v1048
      %v1081 = vtanh.pop %v1049
      %v1082 = vtanh.pop %v1050
      %v1083 = vtanh.pop %v1051
      %v1084 = vtanh.pop %v1052
      %v1085 = vtanh.pop %v1053
      %v1086 = vtanh.pop %v1054
      %v1087 = vtanh.pop %v1055
      %v1088 = vtanh.pop %v1056
      %v1089 = vtanh.pop %v1057
      %v1090 = vtanh.pop %v1058
      %v1091 = vtanh.pop %v1059
      %v1092 = vtanh.pop %v1060
      %v1093 = vtanh.pop %v1061
      %v1094 = vtanh.pop %v1062
      %v1095 = vtanh.pop %v1063
      %v1096 = vtanh.pop %v1064
      %v1097 = vtanh.pop %v1065
      %v1098 = vtanh.pop %v1066
      %v1099 = vtanh.pop %v1067
      %v1100 = vtanh.pop %v1068
      %v1101 = vtanh.pop %v1069
      %v1102 = vtanh.pop %v1070
      %v1103 = vtanh.pop %v1071
      %v1104 = vtanh.pop %v1072
      %v1105 = vtanh.pop %v1073
      %v1106 = vtanh.pop %v1074
      %v1107 = vtanh.pop %v1075
      %v1108 = vtanh.pop %v1076
      %v1109 = vtanh.pop %v1077
      %v1110 = vtanh.pop %v1078
      %v1111 = vadd.f32 %v1079, 1.0
      %v1112 = vadd.f32 %v1080, 1.0
      %v1113 = vadd.f32 %v1081, 1.0
      %v1114 = vadd.f32 %v1082, 1.0
      %v1115 = vadd.f32 %v1083, 1.0
      %v1116 = vadd.f32 %v1084, 1.0
      %v1117 = vadd.f32 %v1085, 1.0
      %v1118 = vadd.f32 %v1086, 1.0
      %v1119 = vadd.f32 %v1087, 1.0
      %v1120 = vadd.f32 %v1088, 1.0
      %v1121 = vadd.f32 %v1089, 1.0
      %v1122 = vadd.f32 %v1090, 1.0
      %v1123 = vadd.f32 %v1091, 1.0
      %v1124 = vadd.f32 %v1092, 1.0
      %v1125 = vadd.f32 %v1093, 1.0
      %v1126 = vadd.f32 %v1094, 1.0
      %v1127 = vadd.f32 %v1095, 1.0
      %v1128 = vadd.f32 %v1096, 1.0
      %v1129 = vadd.f32 %v1097, 1.0
      %v1130 = vadd.f32 %v1098, 1.0
      %v1131 = vadd.f32 %v1099, 1.0
      %v1132 = vadd.f32 %v1100, 1.0
      %v1133 = vadd.f32 %v1101, 1.0
      %v1134 = vadd.f32 %v1102, 1.0
      %v1135 = vadd.f32 %v1103, 1.0
      %v1136 = vadd.f32 %v1104, 1.0
      %v1137 = vadd.f32 %v1105, 1.0
      %v1138 = vadd.f32 %v1106, 1.0
      %v1139 = vadd.f32 %v1107, 1.0
      %v1140 = vadd.f32 %v1108, 1.0
      %v1141 = vadd.f32 %v1109, 1.0
      %v1142 = vadd.f32 %v1110, 1.0
      %v1143 = vmul.f32 %v1111, 0.5
      %v1144 = vmul.f32 %v1112, 0.5
      %v1145 = vmul.f32 %v1113, 0.5
      %v1146 = vmul.f32 %v1114, 0.5
      %v1147 = vmul.f32 %v1115, 0.5
      %v1148 = vmul.f32 %v1116, 0.5
      %v1149 = vmul.f32 %v1117, 0.5
      %v1150 = vmul.f32 %v1118, 0.5
      %v1151 = vmul.f32 %v1119, 0.5
      %v1152 = vmul.f32 %v1120, 0.5
      %v1153 = vmul.f32 %v1121, 0.5
      %v1154 = vmul.f32 %v1122, 0.5
      %v1155 = vmul.f32 %v1123, 0.5
      %v1156 = vmul.f32 %v1124, 0.5
      %v1157 = vmul.f32 %v1125, 0.5
      %v1158 = vmul.f32 %v1126, 0.5
      %v1159 = vmul.f32 %v1127, 0.5
      %v1160 = vmul.f32 %v1128, 0.5
      %v1161 = vmul.f32 %v1129, 0.5
      %v1162 = vmul.f32 %v1130, 0.5
      %v1163 = vmul.f32 %v1131, 0.5
      %v1164 = vmul.f32 %v1132, 0.5
      %v1165 = vmul.f32 %v1133, 0.5
      %v1166 = vmul.f32 %v1134, 0.5
      %v1167 = vmul.f32 %v1135, 0.5
      %v1168 = vmul.f32 %v1136, 0.5
      %v1169 = vmul.f32 %v1137, 0.5
      %v1170 = vmul.f32 %v1138, 0.5
      %v1171 = vmul.f32 %v1139, 0.5
      %v1172 = vmul.f32 %v1140, 0.5
      %v1173 = vmul.f32 %v1141, 0.5
      %v1174 = vmul.f32 %v1142, 0.5
      %v1175 = vmul.f32 %v824, %v1143
      %v1176 = vmul.f32 %v827, %v1144
      %v1177 = vmul.f32 %v830, %v1145
      %v1178 = vmul.f32 %v833, %v1146
      %v1179 = vmul.f32 %v836, %v1147
      %v1180 = vmul.f32 %v839, %v1148
      %v1181 = vmul.f32 %v842, %v1149
      %v1182 = vmul.f32 %v845, %v1150
      %v1183 = vmul.f32 %v848, %v1151
      %v1184 = vmul.f32 %v851, %v1152
      %v1185 = vmul.f32 %v854, %v1153
      %v1186 = vmul.f32 %v857, %v1154
      %v1187 = vmul.f32 %v860, %v1155
      %v1188 = vmul.f32 %v863, %v1156
      %v1189 = vmul.f32 %v866, %v1157
      %v1190 = vmul.f32 %v869, %v1158
      %v1191 = vmul.f32 %v872, %v1159
      %v1192 = vmul.f32 %v875, %v1160
      %v1193 = vmul.f32 %v878, %v1161
      %v1194 = vmul.f32 %v881, %v1162
      %v1195 = vmul.f32 %v884, %v1163
      %v1196 = vmul.f32 %v887, %v1164
      %v1197 = vmul.f32 %v890, %v1165
      %v1198 = vmul.f32 %v893, %v1166
      %v1199 = vmul.f32 %v896, %v1167
      %v1200 = vmul.f32 %v899, %v1168
      %v1201 = vmul.f32 %v902, %v1169
      %v1202 = vmul.f32 %v905, %v1170
      %v1203 = vmul.f32 %v908, %v1171
      %v1204 = vmul.f32 %v911, %v1172
      %v1205 = vmul.f32 %v914, %v1173
      %v1206 = vmul.f32 %v917, %v1174
      %v1207 = vld [vmem:[%s4] sm:$0xff]
      %v1208 = vld [vmem:[%s4 + $0x8] sm:$0xff]
      %v1209 = vld [vmem:[%s5] sm:$0x1]
      %v1211 = vperm.slane %v1209, 0
      %vm1213 = vcmask 130048
      %v1215 = vsel %vm1213, %v1175, 0
      %v1218 = vsel %vm1213, %v1176, 0
      %v1221 = vsel %vm1213, %v1177, 0
      %v1224 = vsel %vm1213, %v1178, 0
      %v1227 = vsel %vm1213, %v1179, 0
      %v1230 = vsel %vm1213, %v1180, 0
      %v1233 = vsel %vm1213, %v1181, 0
      %v1236 = vsel %vm1213, %v1182, 0
      %v1239 = vsel %vm1213, %v1183, 0
      %v1242 = vsel %vm1213, %v1184, 0
      %v1245 = vsel %vm1213, %v1185, 0
      %v1248 = vsel %vm1213, %v1186, 0
      %v1251 = vsel %vm1213, %v1187, 0
      %v1254 = vsel %vm1213, %v1188, 0
      %v1257 = vsel %vm1213, %v1189, 0
      %v1260 = vsel %vm1213, %v1190, 0
      %v1263 = vsel %vm1213, %v1191, 0
      %v1266 = vsel %vm1213, %v1192, 0
      %v1269 = vsel %vm1213, %v1193, 0
      %v1272 = vsel %vm1213, %v1194, 0
      %v1275 = vsel %vm1213, %v1195, 0
      %v1278 = vsel %vm1213, %v1196, 0
      %v1281 = vsel %vm1213, %v1197, 0
      %v1284 = vsel %vm1213, %v1198, 0
      %v1287 = vsel %vm1213, %v1199, 0
      %v1290 = vsel %vm1213, %v1200, 0
      %v1293 = vsel %vm1213, %v1201, 0
      %v1296 = vsel %vm1213, %v1202, 0
      %v1299 = vsel %vm1213, %v1203, 0
      %v1302 = vsel %vm1213, %v1204, 0
      %v1305 = vsel %vm1213, %v1205, 0
      %v1308 = vsel %vm1213, %v1206, 0
      %1310 = vmatpush.msra.mxu0 0.0
      %1311 = vmatpush.msra.mxu0 0.0
      %1312 = vmatpush.msra.mxu0 0.0
      %1313 = vmatpush.msra.mxu0 0.0
      %1314 = vmatpush.msra.mxu0 0.0
      %1315 = vmatpush.msra.mxu0 0.0
      %1316 = vmatpush.msra.mxu0 0.0
      %1317 = vmatpush.msra.mxu0 0.0
      %1318 = vmatpush.msra.mxu0 0.0
      %1319 = vmatpush.msra.mxu0 0.0
      %1320 = vmatpush.msra.mxu0 0.0
      %1321 = vmatpush.msra.mxu0 0.0
      %1322 = vmatpush.msra.mxu0 0.0
      %1323 = vmatpush.msra.mxu0 0.0
      %1324 = vmatpush.msra.mxu0 %v1208
      %1325 = vmatpush.msra.mxu0 %v1207
      %1326 = vmatmul.f32.gmra.mxu0 %v1215
      %v1327 = vpop.f32.mrf.mxu0
      %v1328 = vadd.f32 %v1211, %v1327
      %1329 = vmatmul.f32.gmra.mxu0 %v1218
      %v1330 = vpop.f32.mrf.mxu0
      %v1331 = vadd.f32 %v1211, %v1330
      %1332 = vmatmul.f32.gmra.mxu0 %v1221
      %v1333 = vpop.f32.mrf.mxu0
      %v1334 = vadd.f32 %v1211, %v1333
      %1335 = vmatmul.f32.gmra.mxu0 %v1224
      %v1336 = vpop.f32.mrf.mxu0
      %v1337 = vadd.f32 %v1211, %v1336
      %1338 = vmatmul.f32.gmra.mxu0 %v1227
      %v1339 = vpop.f32.mrf.mxu0
      %v1340 = vadd.f32 %v1211, %v1339
      %1341 = vmatmul.f32.gmra.mxu0 %v1230
      %v1342 = vpop.f32.mrf.mxu0
      %v1343 = vadd.f32 %v1211, %v1342
      %1344 = vmatmul.f32.gmra.mxu0 %v1233
      %v1345 = vpop.f32.mrf.mxu0
      %v1346 = vadd.f32 %v1211, %v1345
      %1347 = vmatmul.f32.gmra.mxu0 %v1236
      %v1348 = vpop.f32.mrf.mxu0
      %v1349 = vadd.f32 %v1211, %v1348
      %1350 = vmatmul.f32.gmra.mxu0 %v1239
      %v1351 = vpop.f32.mrf.mxu0
      %v1352 = vadd.f32 %v1211, %v1351
      %1353 = vmatmul.f32.gmra.mxu0 %v1242
      %v1354 = vpop.f32.mrf.mxu0
      %v1355 = vadd.f32 %v1211, %v1354
      %1356 = vmatmul.f32.gmra.mxu0 %v1245
      %v1357 = vpop.f32.mrf.mxu0
      %v1358 = vadd.f32 %v1211, %v1357
      %1359 = vmatmul.f32.gmra.mxu0 %v1248
      %v1360 = vpop.f32.mrf.mxu0
      %v1361 = vadd.f32 %v1211, %v1360
      %1362 = vmatmul.f32.gmra.mxu0 %v1251
      %v1363 = vpop.f32.mrf.mxu0
      %v1364 = vadd.f32 %v1211, %v1363
      %1365 = vmatmul.f32.gmra.mxu0 %v1254
      %v1366 = vpop.f32.mrf.mxu0
      %v1367 = vadd.f32 %v1211, %v1366
      %1368 = vmatmul.f32.gmra.mxu0 %v1257
      %v1369 = vpop.f32.mrf.mxu0
      %v1370 = vadd.f32 %v1211, %v1369
      %1371 = vmatmul.f32.gmra.mxu0 %v1260
      %v1372 = vpop.f32.mrf.mxu0
      %v1373 = vadd.f32 %v1211, %v1372
      %1374 = vmatmul.f32.gmra.mxu0 %v1263
      %v1375 = vpop.f32.mrf.mxu0
      %v1376 = vadd.f32 %v1211, %v1375
      %1377 = vmatmul.f32.gmra.mxu0 %v1266
      %v1378 = vpop.f32.mrf.mxu0
      %v1379 = vadd.f32 %v1211, %v1378
      %1380 = vmatmul.f32.gmra.mxu0 %v1269
      %v1381 = vpop.f32.mrf.mxu0
      %v1382 = vadd.f32 %v1211, %v1381
      %1383 = vmatmul.f32.gmra.mxu0 %v1272
      %v1384 = vpop.f32.mrf.mxu0
      %v1385 = vadd.f32 %v1211, %v1384
      %1386 = vmatmul.f32.gmra.mxu0 %v1275
      %v1387 = vpop.f32.mrf.mxu0
      %v1388 = vadd.f32 %v1211, %v1387
      %1389 = vmatmul.f32.gmra.mxu0 %v1278
      %v1390 = vpop.f32.mrf.mxu0
      %v1391 = vadd.f32 %v1211, %v1390
      %1392 = vmatmul.f32.gmra.mxu0 %v1281
      %v1393 = vpop.f32.mrf.mxu0
      %v1394 = vadd.f32 %v1211, %v1393
      %1395 = vmatmul.f32.gmra.mxu0 %v1284
      %v1396 = vpop.f32.mrf.mxu0
      %v1397 = vadd.f32 %v1211, %v1396
      %1398 = vmatmul.f32.gmra.mxu0 %v1287
      %v1399 = vpop.f32.mrf.mxu0
      %v1400 = vadd.f32 %v1211, %v1399
      %1401 = vmatmul.f32.gmra.mxu0 %v1290
      %v1402 = vpop.f32.mrf.mxu0
      %v1403 = vadd.f32 %v1211, %v1402
      %1404 = vmatmul.f32.gmra.mxu0 %v1293
      %v1405 = vpop.f32.mrf.mxu0
      %v1406 = vadd.f32 %v1211, %v1405
      %1407 = vmatmul.f32.gmra.mxu0 %v1296
      %v1408 = vpop.f32.mrf.mxu0
      %v1409 = vadd.f32 %v1211, %v1408
      %1410 = vmatmul.f32.gmra.mxu0 %v1299
      %v1411 = vpop.f32.mrf.mxu0
      %v1412 = vadd.f32 %v1211, %v1411
      %1413 = vmatmul.f32.gmra.mxu0 %v1302
      %v1414 = vpop.f32.mrf.mxu0
      %v1415 = vadd.f32 %v1211, %v1414
      %1416 = vmatmul.f32.gmra.mxu0 %v1305
      %v1417 = vpop.f32.mrf.mxu0
      %v1418 = vadd.f32 %v1211, %v1417
      %1419 = vmatmul.f32.gmra.mxu0 %v1308
      %v1420 = vpop.f32.mrf.mxu0
      %v1421 = vadd.f32 %v1211, %v1420
      %1422 = vdwg.mxu0
      %v1423 = vmul.f32 %v1328, %v1328
      %v1424 = vmul.f32 %v1331, %v1331
      %v1425 = vmul.f32 %v1334, %v1334
      %v1426 = vmul.f32 %v1337, %v1337
      %v1427 = vmul.f32 %v1340, %v1340
      %v1428 = vmul.f32 %v1343, %v1343
      %v1429 = vmul.f32 %v1346, %v1346
      %v1430 = vmul.f32 %v1349, %v1349
      %v1431 = vmul.f32 %v1352, %v1352
      %v1432 = vmul.f32 %v1355, %v1355
      %v1433 = vmul.f32 %v1358, %v1358
      %v1434 = vmul.f32 %v1361, %v1361
      %v1435 = vmul.f32 %v1364, %v1364
      %v1436 = vmul.f32 %v1367, %v1367
      %v1437 = vmul.f32 %v1370, %v1370
      %v1438 = vmul.f32 %v1373, %v1373
      %v1439 = vmul.f32 %v1376, %v1376
      %v1440 = vmul.f32 %v1379, %v1379
      %v1441 = vmul.f32 %v1382, %v1382
      %v1442 = vmul.f32 %v1385, %v1385
      %v1443 = vmul.f32 %v1388, %v1388
      %v1444 = vmul.f32 %v1391, %v1391
      %v1445 = vmul.f32 %v1394, %v1394
      %v1446 = vmul.f32 %v1397, %v1397
      %v1447 = vmul.f32 %v1400, %v1400
      %v1448 = vmul.f32 %v1403, %v1403
      %v1449 = vmul.f32 %v1406, %v1406
      %v1450 = vmul.f32 %v1409, %v1409
      %v1451 = vmul.f32 %v1412, %v1412
      %v1452 = vmul.f32 %v1415, %v1415
      %v1453 = vmul.f32 %v1418, %v1418
      %v1454 = vmul.f32 %v1421, %v1421
      %v1455 = vmul.f32 %v1328, %v1423
      %v1456 = vmul.f32 %v1331, %v1424
      %v1457 = vmul.f32 %v1334, %v1425
      %v1458 = vmul.f32 %v1337, %v1426
      %v1459 = vmul.f32 %v1340, %v1427
      %v1460 = vmul.f32 %v1343, %v1428
      %v1461 = vmul.f32 %v1346, %v1429
      %v1462 = vmul.f32 %v1349, %v1430
      %v1463 = vmul.f32 %v1352, %v1431
      %v1464 = vmul.f32 %v1355, %v1432
      %v1465 = vmul.f32 %v1358, %v1433
      %v1466 = vmul.f32 %v1361, %v1434
      %v1467 = vmul.f32 %v1364, %v1435
      %v1468 = vmul.f32 %v1367, %v1436
      %v1469 = vmul.f32 %v1370, %v1437
      %v1470 = vmul.f32 %v1373, %v1438
      %v1471 = vmul.f32 %v1376, %v1439
      %v1472 = vmul.f32 %v1379, %v1440
      %v1473 = vmul.f32 %v1382, %v1441
      %v1474 = vmul.f32 %v1385, %v1442
      %v1475 = vmul.f32 %v1388, %v1443
      %v1476 = vmul.f32 %v1391, %v1444
      %v1477 = vmul.f32 %v1394, %v1445
      %v1478 = vmul.f32 %v1397, %v1446
      %v1479 = vmul.f32 %v1400, %v1447
      %v1480 = vmul.f32 %v1403, %v1448
      %v1481 = vmul.f32 %v1406, %v1449
      %v1482 = vmul.f32 %v1409, %v1450
      %v1483 = vmul.f32 %v1412, %v1451
      %v1484 = vmul.f32 %v1415, %v1452
      %v1485 = vmul.f32 %v1418, %v1453
      %v1486 = vmul.f32 %v1421, %v1454
      %v1487 = vmul.f32 %v1455, 0.044715
      %v1488 = vmul.f32 %v1456, 0.044715
      %v1489 = vmul.f32 %v1457, 0.044715
      %v1490 = vmul.f32 %v1458, 0.044715
      %v1491 = vmul.f32 %v1459, 0.044715
      %v1492 = vmul.f32 %v1460, 0.044715
      %v1493 = vmul.f32 %v1461, 0.044715
      %v1494 = vmul.f32 %v1462, 0.044715
      %v1495 = vmul.f32 %v1463, 0.044715
      %v1496 = vmul.f32 %v1464, 0.044715
      %v1497 = vmul.f32 %v1465, 0.044715
      %v1498 = vmul.f32 %v1466, 0.044715
      %v1499 = vmul.f32 %v1467, 0.044715
      %v1500 = vmul.f32 %v1468, 0.044715
      %v1501 = vmul.f32 %v1469, 0.044715
      %v1502 = vmul.f32 %v1470, 0.044715
      %v1503 = vmul.f32 %v1471, 0.044715
      %v1504 = vmul.f32 %v1472, 0.044715
      %v1505 = vmul.f32 %v1473, 0.044715
      %v1506 = vmul.f32 %v1474, 0.044715
      %v1507 = vmul.f32 %v1475, 0.044715
      %v1508 = vmul.f32 %v1476, 0.044715
      %v1509 = vmul.f32 %v1477, 0.044715
      %v1510 = vmul.f32 %v1478, 0.044715
      %v1511 = vmul.f32 %v1479, 0.044715
      %v1512 = vmul.f32 %v1480, 0.044715
      %v1513 = vmul.f32 %v1481, 0.044715
      %v1514 = vmul.f32 %v1482, 0.044715
      %v1515 = vmul.f32 %v1483, 0.044715
      %v1516 = vmul.f32 %v1484, 0.044715
      %v1517 = vmul.f32 %v1485, 0.044715
      %v1518 = vmul.f32 %v1486, 0.044715
      %v1519 = vadd.f32 %v1328, %v1487
      %v1520 = vadd.f32 %v1331, %v1488
      %v1521 = vadd.f32 %v1334, %v1489
      %v1522 = vadd.f32 %v1337, %v1490
      %v1523 = vadd.f32 %v1340, %v1491
      %v1524 = vadd.f32 %v1343, %v1492
      %v1525 = vadd.f32 %v1346, %v1493
      %v1526 = vadd.f32 %v1349, %v1494
      %v1527 = vadd.f32 %v1352, %v1495
      %v1528 = vadd.f32 %v1355, %v1496
      %v1529 = vadd.f32 %v1358, %v1497
      %v1530 = vadd.f32 %v1361, %v1498
      %v1531 = vadd.f32 %v1364, %v1499
      %v1532 = vadd.f32 %v1367, %v1500
      %v1533 = vadd.f32 %v1370, %v1501
      %v1534 = vadd.f32 %v1373, %v1502
      %v1535 = vadd.f32 %v1376, %v1503
      %v1536 = vadd.f32 %v1379, %v1504
      %v1537 = vadd.f32 %v1382, %v1505
      %v1538 = vadd.f32 %v1385, %v1506
      %v1539 = vadd.f32 %v1388, %v1507
      %v1540 = vadd.f32 %v1391, %v1508
      %v1541 = vadd.f32 %v1394, %v1509
      %v1542 = vadd.f32 %v1397, %v1510
      %v1543 = vadd.f32 %v1400, %v1511
      %v1544 = vadd.f32 %v1403, %v1512
      %v1545 = vadd.f32 %v1406, %v1513
      %v1546 = vadd.f32 %v1409, %v1514
      %v1547 = vadd.f32 %v1412, %v1515
      %v1548 = vadd.f32 %v1415, %v1516
      %v1549 = vadd.f32 %v1418, %v1517
      %v1550 = vadd.f32 %v1421, %v1518
      %v1551 = vmul.f32 %v1519, 0.7978846
      %v1552 = vmul.f32 %v1520, 0.7978846
      %v1553 = vmul.f32 %v1521, 0.7978846
      %v1554 = vmul.f32 %v1522, 0.7978846
      %v1555 = vmul.f32 %v1523, 0.7978846
      %v1556 = vmul.f32 %v1524, 0.7978846
      %v1557 = vmul.f32 %v1525, 0.7978846
      %v1558 = vmul.f32 %v1526, 0.7978846
      %v1559 = vmul.f32 %v1527, 0.7978846
      %v1560 = vmul.f32 %v1528, 0.7978846
      %v1561 = vmul.f32 %v1529, 0.7978846
      %v1562 = vmul.f32 %v1530, 0.7978846
      %v1563 = vmul.f32 %v1531, 0.7978846
      %v1564 = vmul.f32 %v1532, 0.7978846
      %v1565 = vmul.f32 %v1533, 0.7978846
      %v1566 = vmul.f32 %v1534, 0.7978846
      %v1567 = vmul.f32 %v1535, 0.7978846
      %v1568 = vmul.f32 %v1536, 0.7978846
      %v1569 = vmul.f32 %v1537, 0.7978846
      %v1570 = vmul.f32 %v1538, 0.7978846
      %v1571 = vmul.f32 %v1539, 0.7978846
      %v1572 = vmul.f32 %v1540, 0.7978846
      %v1573 = vmul.f32 %v1541, 0.7978846
      %v1574 = vmul.f32 %v1542, 0.7978846
      %v1575 = vmul.f32 %v1543, 0.7978846
      %v1576 = vmul.f32 %v1544, 0.7978846
      %v1577 = vmul.f32 %v1545, 0.7978846
      %v1578 = vmul.f32 %v1546, 0.7978846
      %v1579 = vmul.f32 %v1547, 0.7978846
      %v1580 = vmul.f32 %v1548, 0.7978846
      %v1581 = vmul.f32 %v1549, 0.7978846
      %v1582 = vmul.f32 %v1550, 0.7978846
      %v1583 = vtanh.pop %v1551
      %v1584 = vtanh.pop %v1552
      %v1585 = vtanh.pop %v1553
      %v1586 = vtanh.pop %v1554
      %v1587 = vtanh.pop %v1555
      %v1588 = vtanh.pop %v1556
      %v1589 = vtanh.pop %v1557
      %v1590 = vtanh.pop %v1558
      %v1591 = vtanh.pop %v1559
      %v1592 = vtanh.pop %v1560
      %v1593 = vtanh.pop %v1561
      %v1594 = vtanh.pop %v1562
      %v1595 = vtanh.pop %v1563
      %v1596 = vtanh.pop %v1564
      %v1597 = vtanh.pop %v1565
      %v1598 = vtanh.pop %v1566
      %v1599 = vtanh.pop %v1567
      %v1600 = vtanh.pop %v1568
      %v1601 = vtanh.pop %v1569
      %v1602 = vtanh.pop %v1570
      %v1603 = vtanh.pop %v1571
      %v1604 = vtanh.pop %v1572
      %v1605 = vtanh.pop %v1573
      %v1606 = vtanh.pop %v1574
      %v1607 = vtanh.pop %v1575
      %v1608 = vtanh.pop %v1576
      %v1609 = vtanh.pop %v1577
      %v1610 = vtanh.pop %v1578
      %v1611 = vtanh.pop %v1579
      %v1612 = vtanh.pop %v1580
      %v1613 = vtanh.pop %v1581
      %v1614 = vtanh.pop %v1582
      %v1615 = vadd.f32 %v1583, 1.0
      %v1616 = vadd.f32 %v1584, 1.0
      %v1617 = vadd.f32 %v1585, 1.0
      %v1618 = vadd.f32 %v1586, 1.0
      %v1619 = vadd.f32 %v1587, 1.0
      %v1620 = vadd.f32 %v1588, 1.0
      %v1621 = vadd.f32 %v1589, 1.0
      %v1622 = vadd.f32 %v1590, 1.0
      %v1623 = vadd.f32 %v1591, 1.0
      %v1624 = vadd.f32 %v1592, 1.0
      %v1625 = vadd.f32 %v1593, 1.0
      %v1626 = vadd.f32 %v1594, 1.0
      %v1627 = vadd.f32 %v1595, 1.0
      %v1628 = vadd.f32 %v1596, 1.0
      %v1629 = vadd.f32 %v1597, 1.0
      %v1630 = vadd.f32 %v1598, 1.0
      %v1631 = vadd.f32 %v1599, 1.0
      %v1632 = vadd.f32 %v1600, 1.0
      %v1633 = vadd.f32 %v1601, 1.0
      %v1634 = vadd.f32 %v1602, 1.0
      %v1635 = vadd.f32 %v1603, 1.0
      %v1636 = vadd.f32 %v1604, 1.0
      %v1637 = vadd.f32 %v1605, 1.0
      %v1638 = vadd.f32 %v1606, 1.0
      %v1639 = vadd.f32 %v1607, 1.0
      %v1640 = vadd.f32 %v1608, 1.0
      %v1641 = vadd.f32 %v1609, 1.0
      %v1642 = vadd.f32 %v1610, 1.0
      %v1643 = vadd.f32 %v1611, 1.0
      %v1644 = vadd.f32 %v1612, 1.0
      %v1645 = vadd.f32 %v1613, 1.0
      %v1646 = vadd.f32 %v1614, 1.0
      %v1647 = vmul.f32 %v1615, 0.5
      %v1648 = vmul.f32 %v1616, 0.5
      %v1649 = vmul.f32 %v1617, 0.5
      %v1650 = vmul.f32 %v1618, 0.5
      %v1651 = vmul.f32 %v1619, 0.5
      %v1652 = vmul.f32 %v1620, 0.5
      %v1653 = vmul.f32 %v1621, 0.5
      %v1654 = vmul.f32 %v1622, 0.5
      %v1655 = vmul.f32 %v1623, 0.5
      %v1656 = vmul.f32 %v1624, 0.5
      %v1657 = vmul.f32 %v1625, 0.5
      %v1658 = vmul.f32 %v1626, 0.5
      %v1659 = vmul.f32 %v1627, 0.5
      %v1660 = vmul.f32 %v1628, 0.5
      %v1661 = vmul.f32 %v1629, 0.5
      %v1662 = vmul.f32 %v1630, 0.5
      %v1663 = vmul.f32 %v1631, 0.5
      %v1664 = vmul.f32 %v1632, 0.5
      %v1665 = vmul.f32 %v1633, 0.5
      %v1666 = vmul.f32 %v1634, 0.5
      %v1667 = vmul.f32 %v1635, 0.5
      %v1668 = vmul.f32 %v1636, 0.5
      %v1669 = vmul.f32 %v1637, 0.5
      %v1670 = vmul.f32 %v1638, 0.5
      %v1671 = vmul.f32 %v1639, 0.5
      %v1672 = vmul.f32 %v1640, 0.5
      %v1673 = vmul.f32 %v1641, 0.5
      %v1674 = vmul.f32 %v1642, 0.5
      %v1675 = vmul.f32 %v1643, 0.5
      %v1676 = vmul.f32 %v1644, 0.5
      %v1677 = vmul.f32 %v1645, 0.5
      %v1678 = vmul.f32 %v1646, 0.5
      %v1679 = vmul.f32 %v1328, %v1647
      %v1680 = vmul.f32 %v1331, %v1648
      %v1681 = vmul.f32 %v1334, %v1649
      %v1682 = vmul.f32 %v1337, %v1650
      %v1683 = vmul.f32 %v1340, %v1651
      %v1684 = vmul.f32 %v1343, %v1652
      %v1685 = vmul.f32 %v1346, %v1653
      %v1686 = vmul.f32 %v1349, %v1654
      %v1687 = vmul.f32 %v1352, %v1655
      %v1688 = vmul.f32 %v1355, %v1656
      %v1689 = vmul.f32 %v1358, %v1657
      %v1690 = vmul.f32 %v1361, %v1658
      %v1691 = vmul.f32 %v1364, %v1659
      %v1692 = vmul.f32 %v1367, %v1660
      %v1693 = vmul.f32 %v1370, %v1661
      %v1694 = vmul.f32 %v1373, %v1662
      %v1695 = vmul.f32 %v1376, %v1663
      %v1696 = vmul.f32 %v1379, %v1664
      %v1697 = vmul.f32 %v1382, %v1665
      %v1698 = vmul.f32 %v1385, %v1666
      %v1699 = vmul.f32 %v1388, %v1667
      %v1700 = vmul.f32 %v1391, %v1668
      %v1701 = vmul.f32 %v1394, %v1669
      %v1702 = vmul.f32 %v1397, %v1670
      %v1703 = vmul.f32 %v1400, %v1671
      %v1704 = vmul.f32 %v1403, %v1672
      %v1705 = vmul.f32 %v1406, %v1673
      %v1706 = vmul.f32 %v1409, %v1674
      %v1707 = vmul.f32 %v1412, %v1675
      %v1708 = vmul.f32 %v1415, %v1676
      %v1709 = vmul.f32 %v1418, %v1677
      %v1710 = vmul.f32 %v1421, %v1678
      %v1711 = vld [vmem:[%s6] sm:$0xff]
      %v1712 = vld [vmem:[%s6 + $0x8] sm:$0xff]
      %v1713 = vld [vmem:[%s6 + $0x10] sm:$0xff]
      %v1714 = vld [vmem:[%s6 + $0x18] sm:$0xff]
      %v1715 = vld [vmem:[%s7] sm:$0x1]
      %v1717 = vperm.slane %v1715, 0
      %vm1719 = vcmask 261120
      %v1721 = vsel %vm1719, %v1679, 0
      %v1724 = vsel %vm1719, %v1680, 0
      %v1727 = vsel %vm1719, %v1681, 0
      %v1730 = vsel %vm1719, %v1682, 0
      %v1733 = vsel %vm1719, %v1683, 0
      %v1736 = vsel %vm1719, %v1684, 0
      %v1739 = vsel %vm1719, %v1685, 0
      %v1742 = vsel %vm1719, %v1686, 0
      %v1745 = vsel %vm1719, %v1687, 0
      %v1748 = vsel %vm1719, %v1688, 0
      %v1751 = vsel %vm1719, %v1689, 0
      %v1754 = vsel %vm1719, %v1690, 0
      %v1757 = vsel %vm1719, %v1691, 0
      %v1760 = vsel %vm1719, %v1692, 0
      %v1763 = vsel %vm1719, %v1693, 0
      %v1766 = vsel %vm1719, %v1694, 0
      %v1769 = vsel %vm1719, %v1695, 0
      %v1772 = vsel %vm1719, %v1696, 0
      %v1775 = vsel %vm1719, %v1697, 0
      %v1778 = vsel %vm1719, %v1698, 0
      %v1781 = vsel %vm1719, %v1699, 0
      %v1784 = vsel %vm1719, %v1700, 0
      %v1787 = vsel %vm1719, %v1701, 0
      %v1790 = vsel %vm1719, %v1702, 0
      %v1793 = vsel %vm1719, %v1703, 0
      %v1796 = vsel %vm1719, %v1704, 0
      %v1799 = vsel %vm1719, %v1705, 0
      %v1802 = vsel %vm1719, %v1706, 0
      %v1805 = vsel %vm1719, %v1707, 0
      %v1808 = vsel %vm1719, %v1708, 0
      %v1811 = vsel %vm1719, %v1709, 0
      %v1814 = vsel %vm1719, %v1710, 0
      %1816 = vmatpush.msra.mxu0 0.0
      %1817 = vmatpush.msra.mxu0 0.0
      %1818 = vmatpush.msra.mxu0 0.0
      %1819 = vmatpush.msra.mxu0 0.0
      %1820 = vmatpush.msra.mxu0 0.0
      %1821 = vmatpush.msra.mxu0 0.0
      %1822 = vmatpush.msra.mxu0 0.0
      %1823 = vmatpush.msra.mxu0 0.0
      %1824 = vmatpush.msra.mxu0 0.0
      %1825 = vmatpush.msra.mxu0 0.0
      %1826 = vmatpush.msra.mxu0 0.0
      %1827 = vmatpush.msra.mxu0 0.0
      %1828 = vmatpush.msra.mxu0 %v1714
      %1829 = vmatpush.msra.mxu0 %v1713
      %1830 = vmatpush.msra.mxu0 %v1712
      %1831 = vmatpush.msra.mxu0 %v1711
      %1832 = vmatmul.f32.gmra.mxu0 %v1721
      %v1833 = vpop.f32.mrf.mxu0
      %v1834 = vadd.f32 %v1717, %v1833
      %1835 = vmatmul.f32.gmra.mxu0 %v1724
      %v1836 = vpop.f32.mrf.mxu0
      %v1837 = vadd.f32 %v1717, %v1836
      %1838 = vmatmul.f32.gmra.mxu0 %v1727
      %v1839 = vpop.f32.mrf.mxu0
      %v1840 = vadd.f32 %v1717, %v1839
      %1841 = vmatmul.f32.gmra.mxu0 %v1730
      %v1842 = vpop.f32.mrf.mxu0
      %v1843 = vadd.f32 %v1717, %v1842
      %1844 = vmatmul.f32.gmra.mxu0 %v1733
      %v1845 = vpop.f32.mrf.mxu0
      %v1846 = vadd.f32 %v1717, %v1845
      %1847 = vmatmul.f32.gmra.mxu0 %v1736
      %v1848 = vpop.f32.mrf.mxu0
      %v1849 = vadd.f32 %v1717, %v1848
      %1850 = vmatmul.f32.gmra.mxu0 %v1739
      %v1851 = vpop.f32.mrf.mxu0
      %v1852 = vadd.f32 %v1717, %v1851
      %1853 = vmatmul.f32.gmra.mxu0 %v1742
      %v1854 = vpop.f32.mrf.mxu0
      %v1855 = vadd.f32 %v1717, %v1854
      %1856 = vmatmul.f32.gmra.mxu0 %v1745
      %v1857 = vpop.f32.mrf.mxu0
      %v1858 = vadd.f32 %v1717, %v1857
      %1859 = vmatmul.f32.gmra.mxu0 %v1748
      %v1860 = vpop.f32.mrf.mxu0
      %v1861 = vadd.f32 %v1717, %v1860
      %1862 = vmatmul.f32.gmra.mxu0 %v1751
      %v1863 = vpop.f32.mrf.mxu0
      %v1864 = vadd.f32 %v1717, %v1863
      %1865 = vmatmul.f32.gmra.mxu0 %v1754
      %v1866 = vpop.f32.mrf.mxu0
      %v1867 = vadd.f32 %v1717, %v1866
      %1868 = vmatmul.f32.gmra.mxu0 %v1757
      %v1869 = vpop.f32.mrf.mxu0
      %v1870 = vadd.f32 %v1717, %v1869
      %1871 = vmatmul.f32.gmra.mxu0 %v1760
      %v1872 = vpop.f32.mrf.mxu0
      %v1873 = vadd.f32 %v1717, %v1872
      %1874 = vmatmul.f32.gmra.mxu0 %v1763
      %v1875 = vpop.f32.mrf.mxu0
      %v1876 = vadd.f32 %v1717, %v1875
      %1877 = vmatmul.f32.gmra.mxu0 %v1766
      %v1878 = vpop.f32.mrf.mxu0
      %v1879 = vadd.f32 %v1717, %v1878
      %1880 = vmatmul.f32.gmra.mxu0 %v1769
      %v1881 = vpop.f32.mrf.mxu0
      %v1882 = vadd.f32 %v1717, %v1881
      %1883 = vmatmul.f32.gmra.mxu0 %v1772
      %v1884 = vpop.f32.mrf.mxu0
      %v1885 = vadd.f32 %v1717, %v1884
      %1886 = vmatmul.f32.gmra.mxu0 %v1775
      %v1887 = vpop.f32.mrf.mxu0
      %v1888 = vadd.f32 %v1717, %v1887
      %1889 = vmatmul.f32.gmra.mxu0 %v1778
      %v1890 = vpop.f32.mrf.mxu0
      %v1891 = vadd.f32 %v1717, %v1890
      %1892 = vmatmul.f32.gmra.mxu0 %v1781
      %v1893 = vpop.f32.mrf.mxu0
      %v1894 = vadd.f32 %v1717, %v1893
      %1895 = vmatmul.f32.gmra.mxu0 %v1784
      %v1896 = vpop.f32.mrf.mxu0
      %v1897 = vadd.f32 %v1717, %v1896
      %1898 = vmatmul.f32.gmra.mxu0 %v1787
      %v1899 = vpop.f32.mrf.mxu0
      %v1900 = vadd.f32 %v1717, %v1899
      %1901 = vmatmul.f32.gmra.mxu0 %v1790
      %v1902 = vpop.f32.mrf.mxu0
      %v1903 = vadd.f32 %v1717, %v1902
      %1904 = vmatmul.f32.gmra.mxu0 %v1793
      %v1905 = vpop.f32.mrf.mxu0
      %v1906 = vadd.f32 %v1717, %v1905
      %1907 = vmatmul.f32.gmra.mxu0 %v1796
      %v1908 = vpop.f32.mrf.mxu0
      %v1909 = vadd.f32 %v1717, %v1908
      %1910 = vmatmul.f32.gmra.mxu0 %v1799
      %v1911 = vpop.f32.mrf.mxu0
      %v1912 = vadd.f32 %v1717, %v1911
      %1913 = vmatmul.f32.gmra.mxu0 %v1802
      %v1914 = vpop.f32.mrf.mxu0
      %v1915 = vadd.f32 %v1717, %v1914
      %1916 = vmatmul.f32.gmra.mxu0 %v1805
      %v1917 = vpop.f32.mrf.mxu0
      %v1918 = vadd.f32 %v1717, %v1917
      %1919 = vmatmul.f32.gmra.mxu0 %v1808
      %v1920 = vpop.f32.mrf.mxu0
      %v1921 = vadd.f32 %v1717, %v1920
      %1922 = vmatmul.f32.gmra.mxu0 %v1811
      %v1923 = vpop.f32.mrf.mxu0
      %v1924 = vadd.f32 %v1717, %v1923
      %1925 = vmatmul.f32.gmra.mxu0 %v1814
      %v1926 = vpop.f32.mrf.mxu0
      %v1927 = vadd.f32 %v1717, %v1926
      %1928 = vdwg.mxu0
      %v1929 = vld [vmem:[%s8] sm:$0xff]
      %v1930 = vld [vmem:[%s8 + $0x8] sm:$0xff]
      %v1931 = vld [vmem:[%s9] sm:$0xff]
      %v1932 = vld [vmem:[%s9 + $0x8] sm:$0xff]
      %v1933 = vld [vmem:[%s9 + $0x10] sm:$0xff]
      %v1934 = vld [vmem:[%s9 + $0x18] sm:$0xff]
      %1935 = vmatpush.msra.mxu0 0.0
      %1936 = vmatpush.msra.mxu0 0.0
      %1937 = vmatpush.msra.mxu0 0.0
      %1938 = vmatpush.msra.mxu0 0.0
      %1939 = vmatpush.msra.mxu0 0.0
      %1940 = vmatpush.msra.mxu0 0.0
      %1941 = vmatpush.msra.mxu0 0.0
      %1942 = vmatpush.msra.mxu0 0.0
      %1943 = vmatpush.msra.mxu0 0.0
      %1944 = vmatpush.msra.mxu0 0.0
      %1945 = vmatpush.msra.mxu0 0.0
      %1946 = vmatpush.msra.mxu0 0.0
      %1947 = vmatpush.msra.mxu0 %v1934
      %1948 = vmatpush.msra.mxu0 %v1933
      %1949 = vmatpush.msra.mxu0 %v1932
      %1950 = vmatpush.msra.mxu0 %v1931
      %1951 = vmatmul.f32.gmra.mxu0 %v1721
      %v1952 = vpop.f32.mrf.mxu0
      %v1953 = vadd.f32 0.0, %v1952
      %1954 = vmatmul.f32.gmra.mxu0 %v1724
      %v1955 = vpop.f32.mrf.mxu0
      %v1956 = vadd.f32 0.0, %v1955
      %1957 = vmatmul.f32.gmra.mxu0 %v1727
      %v1958 = vpop.f32.mrf.mxu0
      %v1959 = vadd.f32 0.0, %v1958
      %1960 = vmatmul.f32.gmra.mxu0 %v1730
      %v1961 = vpop.f32.mrf.mxu0
      %v1962 = vadd.f32 0.0, %v1961
      %1963 = vmatmul.f32.gmra.mxu0 %v1733
      %v1964 = vpop.f32.mrf.mxu0
      %v1965 = vadd.f32 0.0, %v1964
      %1966 = vmatmul.f32.gmra.mxu0 %v1736
      %v1967 = vpop.f32.mrf.mxu0
      %v1968 = vadd.f32 0.0, %v1967
      %1969 = vmatmul.f32.gmra.mxu0 %v1739
      %v1970 = vpop.f32.mrf.mxu0
      %v1971 = vadd.f32 0.0, %v1970
      %1972 = vmatmul.f32.gmra.mxu0 %v1742
      %v1973 = vpop.f32.mrf.mxu0
      %v1974 = vadd.f32 0.0, %v1973
      %1975 = vmatmul.f32.gmra.mxu0 %v1745
      %v1976 = vpop.f32.mrf.mxu0
      %v1977 = vadd.f32 0.0, %v1976
      %1978 = vmatmul.f32.gmra.mxu0 %v1748
      %v1979 = vpop.f32.mrf.mxu0
      %v1980 = vadd.f32 0.0, %v1979
      %1981 = vmatmul.f32.gmra.mxu0 %v1751
      %v1982 = vpop.f32.mrf.mxu0
      %v1983 = vadd.f32 0.0, %v1982
      %1984 = vmatmul.f32.gmra.mxu0 %v1754
      %v1985 = vpop.f32.mrf.mxu0
      %v1986 = vadd.f32 0.0, %v1985
      %1987 = vmatmul.f32.gmra.mxu0 %v1757
      %v1988 = vpop.f32.mrf.mxu0
      %v1989 = vadd.f32 0.0, %v1988
      %1990 = vmatmul.f32.gmra.mxu0 %v1760
      %v1991 = vpop.f32.mrf.mxu0
      %v1992 = vadd.f32 0.0, %v1991
      %1993 = vmatmul.f32.gmra.mxu0 %v1763
      %v1994 = vpop.f32.mrf.mxu0
      %v1995 = vadd.f32 0.0, %v1994
      %1996 = vmatmul.f32.gmra.mxu0 %v1766
      %v1997 = vpop.f32.mrf.mxu0
      %v1998 = vadd.f32 0.0, %v1997
      %1999 = vmatmul.f32.gmra.mxu0 %v1769
      %v2000 = vpop.f32.mrf.mxu0
      %v2001 = vadd.f32 0.0, %v2000
      %2002 = vmatmul.f32.gmra.mxu0 %v1772
      %v2003 = vpop.f32.mrf.mxu0
      %v2004 = vadd.f32 0.0, %v2003
      %2005 = vmatmul.f32.gmra.mxu0 %v1775
      %v2006 = vpop.f32.mrf.mxu0
      %v2007 = vadd.f32 0.0, %v2006
      %2008 = vmatmul.f32.gmra.mxu0 %v1778
      %v2009 = vpop.f32.mrf.mxu0
      %v2010 = vadd.f32 0.0, %v2009
      %2011 = vmatmul.f32.gmra.mxu0 %v1781
      %v2012 = vpop.f32.mrf.mxu0
      %v2013 = vadd.f32 0.0, %v2012
      %2014 = vmatmul.f32.gmra.mxu0 %v1784
      %v2015 = vpop.f32.mrf.mxu0
      %v2016 = vadd.f32 0.0, %v2015
      %2017 = vmatmul.f32.gmra.mxu0 %v1787
      %v2018 = vpop.f32.mrf.mxu0
      %v2019 = vadd.f32 0.0, %v2018
      %2020 = vmatmul.f32.gmra.mxu0 %v1790
      %v2021 = vpop.f32.mrf.mxu0
      %v2022 = vadd.f32 0.0, %v2021
      %2023 = vmatmul.f32.gmra.mxu0 %v1793
      %v2024 = vpop.f32.mrf.mxu0
      %v2025 = vadd.f32 0.0, %v2024
      %2026 = vmatmul.f32.gmra.mxu0 %v1796
      %v2027 = vpop.f32.mrf.mxu0
      %v2028 = vadd.f32 0.0, %v2027
      %2029 = vmatmul.f32.gmra.mxu0 %v1799
      %v2030 = vpop.f32.mrf.mxu0
      %v2031 = vadd.f32 0.0, %v2030
      %2032 = vmatmul.f32.gmra.mxu0 %v1802
      %v2033 = vpop.f32.mrf.mxu0
      %v2034 = vadd.f32 0.0, %v2033
      %2035 = vmatmul.f32.gmra.mxu0 %v1805
      %v2036 = vpop.f32.mrf.mxu0
      %v2037 = vadd.f32 0.0, %v2036
      %2038 = vmatmul.f32.gmra.mxu0 %v1808
      %v2039 = vpop.f32.mrf.mxu0
      %v2040 = vadd.f32 0.0, %v2039
      %2041 = vmatmul.f32.gmra.mxu0 %v1811
      %v2042 = vpop.f32.mrf.mxu0
      %v2043 = vadd.f32 0.0, %v2042
      %2044 = vmatmul.f32.gmra.mxu0 %v1814
      %v2045 = vpop.f32.mrf.mxu0
      %v2046 = vadd.f32 0.0, %v2045
      %2047 = vdwg.mxu0
      %v2049 = vsel %vm1213, %v1834, 0
      %v2052 = vsel %vm1213, %v1837, 0
      %v2055 = vsel %vm1213, %v1840, 0
      %v2058 = vsel %vm1213, %v1843, 0
      %v2061 = vsel %vm1213, %v1846, 0
      %v2064 = vsel %vm1213, %v1849, 0
      %v2067 = vsel %vm1213, %v1852, 0
      %v2070 = vsel %vm1213, %v1855, 0
      %v2073 = vsel %vm1213, %v1858, 0
      %v2076 = vsel %vm1213, %v1861, 0
      %v2079 = vsel %vm1213, %v1864, 0
      %v2082 = vsel %vm1213, %v1867, 0
      %v2085 = vsel %vm1213, %v1870, 0
      %v2088 = vsel %vm1213, %v1873, 0
      %v2091 = vsel %vm1213, %v1876, 0
      %v2094 = vsel %vm1213, %v1879, 0
      %v2097 = vsel %vm1213, %v1882, 0
      %v2100 = vsel %vm1213, %v1885, 0
      %v2103 = vsel %vm1213, %v1888, 0
      %v2106 = vsel %vm1213, %v1891, 0
      %v2109 = vsel %vm1213, %v1894, 0
      %v2112 = vsel %vm1213, %v1897, 0
      %v2115 = vsel %vm1213, %v1900, 0
      %v2118 = vsel %vm1213, %v1903, 0
      %v2121 = vsel %vm1213, %v1906, 0
      %v2124 = vsel %vm1213, %v1909, 0
      %v2127 = vsel %vm1213, %v1912, 0
      %v2130 = vsel %vm1213, %v1915, 0
      %v2133 = vsel %vm1213, %v1918, 0
      %v2136 = vsel %vm1213, %v1921, 0
      %v2139 = vsel %vm1213, %v1924, 0
      %v2142 = vsel %vm1213, %v1927, 0
      %2144 = vmatpush.msra.mxu0 0.0
      %2145 = vmatpush.msra.mxu0 0.0
      %2146 = vmatpush.msra.mxu0 0.0
      %2147 = vmatpush.msra.mxu0 0.0
      %2148 = vmatpush.msra.mxu0 0.0
      %2149 = vmatpush.msra.mxu0 0.0
      %2150 = vmatpush.msra.mxu0 0.0
      %2151 = vmatpush.msra.mxu0 0.0
      %2152 = vmatpush.msra.mxu0 0.0
      %2153 = vmatpush.msra.mxu0 0.0
      %2154 = vmatpush.msra.mxu0 0.0
      %2155 = vmatpush.msra.mxu0 0.0
      %2156 = vmatpush.msra.mxu0 0.0
      %2157 = vmatpush.msra.mxu0 0.0
      %2158 = vmatpush.msra.mxu0 %v1930
      %2159 = vmatpush.msra.mxu0 %v1929
      %2160 = vmatmul.f32.gmra.mxu0 %v2049
      %v2161 = vpop.f32.mrf.mxu0
      %v2162 = vadd.f32 %v1953, %v2161
      %2163 = vmatmul.f32.gmra.mxu0 %v2052
      %v2164 = vpop.f32.mrf.mxu0
      %v2165 = vadd.f32 %v1956, %v2164
      %2166 = vmatmul.f32.gmra.mxu0 %v2055
      %v2167 = vpop.f32.mrf.mxu0
      %v2168 = vadd.f32 %v1959, %v2167
      %2169 = vmatmul.f32.gmra.mxu0 %v2058
      %v2170 = vpop.f32.mrf.mxu0
      %v2171 = vadd.f32 %v1962, %v2170
      %2172 = vmatmul.f32.gmra.mxu0 %v2061
      %v2173 = vpop.f32.mrf.mxu0
      %v2174 = vadd.f32 %v1965, %v2173
      %2175 = vmatmul.f32.gmra.mxu0 %v2064
      %v2176 = vpop.f32.mrf.mxu0
      %v2177 = vadd.f32 %v1968, %v2176
      %2178 = vmatmul.f32.gmra.mxu0 %v2067
      %v2179 = vpop.f32.mrf.mxu0
      %v2180 = vadd.f32 %v1971, %v2179
      %2181 = vmatmul.f32.gmra.mxu0 %v2070
      %v2182 = vpop.f32.mrf.mxu0
      %v2183 = vadd.f32 %v1974, %v2182
      %2184 = vmatmul.f32.gmra.mxu0 %v2073
      %v2185 = vpop.f32.mrf.mxu0
      %v2186 = vadd.f32 %v1977, %v2185
      %2187 = vmatmul.f32.gmra.mxu0 %v2076
      %v2188 = vpop.f32.mrf.mxu0
      %v2189 = vadd.f32 %v1980, %v2188
      %2190 = vmatmul.f32.gmra.mxu0 %v2079
      %v2191 = vpop.f32.mrf.mxu0
      %v2192 = vadd.f32 %v1983, %v2191
      %2193 = vmatmul.f32.gmra.mxu0 %v2082
      %v2194 = vpop.f32.mrf.mxu0
      %v2195 = vadd.f32 %v1986, %v2194
      %2196 = vmatmul.f32.gmra.mxu0 %v2085
      %v2197 = vpop.f32.mrf.mxu0
      %v2198 = vadd.f32 %v1989, %v2197
      %2199 = vmatmul.f32.gmra.mxu0 %v2088
      %v2200 = vpop.f32.mrf.mxu0
      %v2201 = vadd.f32 %v1992, %v2200
      %2202 = vmatmul.f32.gmra.mxu0 %v2091
      %v2203 = vpop.f32.mrf.mxu0
      %v2204 = vadd.f32 %v1995, %v2203
      %2205 = vmatmul.f32.gmra.mxu0 %v2094
      %v2206 = vpop.f32.mrf.mxu0
      %v2207 = vadd.f32 %v1998, %v2206
      %2208 = vmatmul.f32.gmra.mxu0 %v2097
      %v2209 = vpop.f32.mrf.mxu0
      %v2210 = vadd.f32 %v2001, %v2209
      %2211 = vmatmul.f32.gmra.mxu0 %v2100
      %v2212 = vpop.f32.mrf.mxu0
      %v2213 = vadd.f32 %v2004, %v2212
      %2214 = vmatmul.f32.gmra.mxu0 %v2103
      %v2215 = vpop.f32.mrf.mxu0
      %v2216 = vadd.f32 %v2007, %v2215
      %2217 = vmatmul.f32.gmra.mxu0 %v2106
      %v2218 = vpop.f32.mrf.mxu0
      %v2219 = vadd.f32 %v2010, %v2218
      %2220 = vmatmul.f32.gmra.mxu0 %v2109
      %v2221 = vpop.f32.mrf.mxu0
      %v2222 = vadd.f32 %v2013, %v2221
      %2223 = vmatmul.f32.gmra.mxu0 %v2112
      %v2224 = vpop.f32.mrf.mxu0
      %v2225 = vadd.f32 %v2016, %v2224
      %2226 = vmatmul.f32.gmra.mxu0 %v2115
      %v2227 = vpop.f32.mrf.mxu0
      %v2228 = vadd.f32 %v2019, %v2227
      %2229 = vmatmul.f32.gmra.mxu0 %v2118
      %v2230 = vpop.f32.mrf.mxu0
      %v2231 = vadd.f32 %v2022, %v2230
      %2232 = vmatmul.f32.gmra.mxu0 %v2121
      %v2233 = vpop.f32.mrf.mxu0
      %v2234 = vadd.f32 %v2025, %v2233
      %2235 = vmatmul.f32.gmra.mxu0 %v2124
      %v2236 = vpop.f32.mrf.mxu0
      %v2237 = vadd.f32 %v2028, %v2236
      %2238 = vmatmul.f32.gmra.mxu0 %v2127
      %v2239 = vpop.f32.mrf.mxu0
      %v2240 = vadd.f32 %v2031, %v2239
      %2241 = vmatmul.f32.gmra.mxu0 %v2130
      %v2242 = vpop.f32.mrf.mxu0
      %v2243 = vadd.f32 %v2034, %v2242
      %2244 = vmatmul.f32.gmra.mxu0 %v2133
      %v2245 = vpop.f32.mrf.mxu0
      %v2246 = vadd.f32 %v2037, %v2245
      %2247 = vmatmul.f32.gmra.mxu0 %v2136
      %v2248 = vpop.f32.mrf.mxu0
      %v2249 = vadd.f32 %v2040, %v2248
      %2250 = vmatmul.f32.gmra.mxu0 %v2139
      %v2251 = vpop.f32.mrf.mxu0
      %v2252 = vadd.f32 %v2043, %v2251
      %2253 = vmatmul.f32.gmra.mxu0 %v2142
      %v2254 = vpop.f32.mrf.mxu0
      %v2255 = vadd.f32 %v2046, %v2254
      %2256 = vdwg.mxu0
      %v2257 = vld [vmem:[%s10] sm:$0x1]
      %v2259 = vperm.slane %v2257, 0
      %v2261 = vadd.f32 %v2162, %v2259
      %v2262 = vadd.f32 %v2165, %v2259
      %v2263 = vadd.f32 %v2168, %v2259
      %v2264 = vadd.f32 %v2171, %v2259
      %v2265 = vadd.f32 %v2174, %v2259
      %v2266 = vadd.f32 %v2177, %v2259
      %v2267 = vadd.f32 %v2180, %v2259
      %v2268 = vadd.f32 %v2183, %v2259
      %v2269 = vadd.f32 %v2186, %v2259
      %v2270 = vadd.f32 %v2189, %v2259
      %v2271 = vadd.f32 %v2192, %v2259
      %v2272 = vadd.f32 %v2195, %v2259
      %v2273 = vadd.f32 %v2198, %v2259
      %v2274 = vadd.f32 %v2201, %v2259
      %v2275 = vadd.f32 %v2204, %v2259
      %v2276 = vadd.f32 %v2207, %v2259
      %v2277 = vadd.f32 %v2210, %v2259
      %v2278 = vadd.f32 %v2213, %v2259
      %v2279 = vadd.f32 %v2216, %v2259
      %v2280 = vadd.f32 %v2219, %v2259
      %v2281 = vadd.f32 %v2222, %v2259
      %v2282 = vadd.f32 %v2225, %v2259
      %v2283 = vadd.f32 %v2228, %v2259
      %v2284 = vadd.f32 %v2231, %v2259
      %v2285 = vadd.f32 %v2234, %v2259
      %v2286 = vadd.f32 %v2237, %v2259
      %v2287 = vadd.f32 %v2240, %v2259
      %v2288 = vadd.f32 %v2243, %v2259
      %v2289 = vadd.f32 %v2246, %v2259
      %v2290 = vadd.f32 %v2249, %v2259
      %v2291 = vadd.f32 %v2252, %v2259
      %v2292 = vadd.f32 %v2255, %v2259
      %2293 = vst [vmem:[%s410] sm:$0xff] %v2261
      %2294 = vst [vmem:[%s410 + $0x8] sm:$0xff] %v2262
      %2295 = vst [vmem:[%s410 + $0x10] sm:$0xff] %v2263
      %2296 = vst [vmem:[%s410 + $0x18] sm:$0xff] %v2264
      %2297 = vst [vmem:[%s410 + $0x20] sm:$0xff] %v2265
      %2298 = vst [vmem:[%s410 + $0x28] sm:$0xff] %v2266
      %2299 = vst [vmem:[%s410 + $0x30] sm:$0xff] %v2267
      %2300 = vst [vmem:[%s410 + $0x38] sm:$0xff] %v2268
      %2301 = vst [vmem:[%s410 + $0x40] sm:$0xff] %v2269
      %2302 = vst [vmem:[%s410 + $0x48] sm:$0xff] %v2270
      %2303 = vst [vmem:[%s410 + $0x50] sm:$0xff] %v2271
      %2304 = vst [vmem:[%s410 + $0x58] sm:$0xff] %v2272
      %2305 = vst [vmem:[%s410 + $0x60] sm:$0xff] %v2273
      %2306 = vst [vmem:[%s410 + $0x68] sm:$0xff] %v2274
      %2307 = vst [vmem:[%s410 + $0x70] sm:$0xff] %v2275
      %2308 = vst [vmem:[%s410 + $0x78] sm:$0xff] %v2276
      %2309 = vst [vmem:[%s410 + $0x80] sm:$0xff] %v2277
      %2310 = vst [vmem:[%s410 + $0x88] sm:$0xff] %v2278
      %2311 = vst [vmem:[%s410 + $0x90] sm:$0xff] %v2279
      %2312 = vst [vmem:[%s410 + $0x98] sm:$0xff] %v2280
      %2313 = vst [vmem:[%s410 + $0xa0] sm:$0xff] %v2281
      %2314 = vst [vmem:[%s410 + $0xa8] sm:$0xff] %v2282
      %2315 = vst [vmem:[%s410 + $0xb0] sm:$0xff] %v2283
      %2316 = vst [vmem:[%s410 + $0xb8] sm:$0xff] %v2284
      %2317 = vst [vmem:[%s410 + $0xc0] sm:$0xff] %v2285
      %2318 = vst [vmem:[%s410 + $0xc8] sm:$0xff] %v2286
      %2319 = vst [vmem:[%s410 + $0xd0] sm:$0xff] %v2287
      %2320 = vst [vmem:[%s410 + $0xd8] sm:$0xff] %v2288
      %2321 = vst [vmem:[%s410 + $0xe0] sm:$0xff] %v2289
      %2322 = vst [vmem:[%s410 + $0xe8] sm:$0xff] %v2290
      %2323 = vst [vmem:[%s410 + $0xf0] sm:$0xff] %v2291
      %2324 = vst [vmem:[%s410 + $0xf8] sm:$0xff] %v2292
      %s2325 = smul.u32 32, %s22
      %p2326 = scmp.lt.s32.totalorder %s2325, 63
      %s2327 = scalar_select %p2326, %s2325, 63
      %s2328 = smul.addr %s2327, 8
      %s2329 = scalar_lea.vmem %s11, %s2328
      // Predicated region
      $region65: #{vit_eraser_segmim_forward.1} parent=63 // pred_check
        %p2330 = pneg %p281
      $region66: #{vit_eraser_segmim_forward.1} parent=63 // pred_check_branch
        %2332 = sbr.rel (%p2330) target = $region68
      $region67: #{vit_eraser_segmim_forward.1} parent=63 // pred_region
        %s2333 = smul.u32 32, %s22
      $region68: #{vit_eraser_segmim_forward.1} parent=63 // pred_fallthru
        _
    $region64: #{vit_eraser_segmim_forward.1} parent=5 // pred_fallthru
      _
    %p2334 = scmp.le.s32.totalorder 2, %s17
    // Predicated region
    $region69: #{vit_eraser_segmim_forward.1} parent=5 // pred_check
      %p2335 = pneg %p2334
    $region70: #{vit_eraser_segmim_forward.1} parent=5 // pred_check_branch
      %2337 = sbr.rel (%p2335) target = $region72
    $region71: #{vit_eraser_segmim_forward.1} parent=5 // pred_region
      %s2338 = ssub.s32 %s17, 2
      // Predicated region
      $region73: #{vit_eraser_segmim_forward.1} parent=71 // pred_check
        %p2339 = pneg %p287
      $region74: #{vit_eraser_segmim_forward.1} parent=71 // pred_check_branch
        %2341 = sbr.rel (%p2339) target = $region76
      $region75: #{vit_eraser_segmim_forward.1} parent=71 // pred_region
        %s2342 = smul.u32 32, %s23
        %p2343 = scmp.lt.s32.totalorder %s2342, 63
        %s2344 = scalar_select %p2343, %s2342, 63
        %s2345 = smul.addr %s2344, 8
        %s2346 = scalar_lea.vmem %s11, %s2345
      $region76: #{vit_eraser_segmim_forward.1} parent=71 // pred_fallthru
        _
    $region72: #{vit_eraser_segmim_forward.1} parent=5 // pred_fallthru
      _
  $region6: #{vit_eraser_segmim_forward.1} parent=0 // loop_footer
    %s21 = sadd.s32 1, %s17
  $region7: #{vit_eraser_segmim_forward.1} parent=0 // loop_footer_branch
    %16 = sbr.rel target = $region3
  $region8: #{vit_eraser_segmim_forward.1} parent=0 // loop_exit
    _

</llo_original>
